<compile_context>
chip_gen: v6e
topology: v6e:2x2x1
jax: 0.10.0
libtpu: 0.0.40
codegen_flags: <defaults>
</compile_context>

<pallas_src>
import functools

import jax
import jax.numpy as jnp
import numpy as np
from jax import lax
from jax.experimental import pallas as pl
from jax.experimental.pallas import tpu as pltpu

LANE = 128


def _round_up(v, m):
    return ((v + m - 1) // m) * m


# --------------------------------------------------------------------------- #
# Kernel
# --------------------------------------------------------------------------- #
def gine_kernel(tile_lo_ref, cnt_ref,                         # scalar prefetch (SMEM)
                eps_ref,                                      # SMEM scalar
                x_ref, xsrc_ref, ef_ref, dst_ref,             # tiled inputs (VMEM)
                w0_ref, b0_ref, w1_ref, b1_ref,               # resident weights (VMEM)
                wa_ref, ba_ref, wb_ref, bb_ref,
                out_ref,                                      # output node tile
                neigh_ref):                                   # VMEM scratch accumulator
    f32 = jnp.float32
    bf16 = jnp.bfloat16
    i = pl.program_id(0)            # node-tile index   ("parallel")
    j = pl.program_id(1)            # edge-tile step    ("arbitrary" reduction)
    tn = neigh_ref.shape[0]
    te = ef_ref.shape[0]

    @pl.when(j == 0)
    def _init():
        neigh_ref[...] = jnp.zeros_like(neigh_ref)

    # Only the edge tiles that actually contain edges destined for this node
    # tile are visited (data-dependent index_map); gate to avoid re-adding the
    # clamped last tile when j >= cnt.
    @pl.when(j < cnt_ref[i])
    def _accumulate():
        # per-edge MLP (edge_transform0 -> edge_transform); bf16 MXU operands,
        # f32 accumulation, f32 bias+relu.
        ef0 = jnp.maximum(
            jnp.dot(ef_ref[...], w0_ref[...], preferred_element_type=f32)
            + b0_ref[...], 0.0)
        eft = jnp.maximum(
            jnp.dot(ef0.astype(bf16), w1_ref[...], preferred_element_type=f32)
            + b1_ref[...], 0.0)
        # message = relu(x[src] + edge_transform(edge_feat))
        m = jnp.maximum(xsrc_ref[...].astype(f32) + eft, 0.0)
        # scatter-add into this node tile: (TN, TE) membership mask built from
        # the lane-dense dst-id row (edges are dst-sorted; padded edges carry a
        # sentinel id that never matches).  Mask is exact in bf16.
        node_base = i * tn
        row_ids = node_base + lax.broadcasted_iota(jnp.int32, (tn, te), 0)
        mask = (dst_ref[...] == row_ids).astype(bf16)
        # [TN,TE] . [TE,D] -> [TN,D] segment sum on the MXU
        neigh_ref[...] += jnp.dot(mask, m.astype(bf16),
                                  preferred_element_type=f32)

    @pl.when(j == pl.num_programs(1) - 1)
    def _finalize():
        eps = eps_ref[0, 0]
        rst = (1.0 + eps) * x_ref[...] + neigh_ref[...]
        h = jnp.maximum(
            jnp.dot(rst.astype(bf16), wa_ref[...], preferred_element_type=f32)
            + ba_ref[...], 0.0)
        out_ref[...] = (jnp.dot(h.astype(bf16), wb_ref[...],
                                preferred_element_type=f32)
                        + bb_ref[...]).astype(out_ref.dtype)


# --------------------------------------------------------------------------- #
# Host-side graph preprocessing (graph glue, O(E log E), concrete numpy)
# --------------------------------------------------------------------------- #
def _prepare_graph(src, dst, n_nodes, tn, te):
    src = np.asarray(src, np.int32)
    dst = np.asarray(dst, np.int32)
    e = src.shape[0]
    order = np.argsort(dst, kind="stable")
    src_s = src[order]
    dst_s = dst[order]

    n_pad = _round_up(n_nodes, tn)
    e_pad = _round_up(max(e, 1), te)
    num_nt = n_pad // tn

    src_pad = np.zeros((e_pad,), np.int32)
    src_pad[:e] = src_s
    dst_pad = np.full((e_pad,), n_pad, np.int32)      # sentinel: matches no node row
    dst_pad[:e] = dst_s

    starts = np.searchsorted(dst_s, np.arange(num_nt) * tn, side="left")
    ends = np.searchsorted(dst_s, (np.arange(num_nt) + 1) * tn, side="left")
    cnt = np.where(ends > starts, (ends - 1) // te - starts // te + 1, 0).astype(np.int32)
    tile_lo = np.where(cnt > 0, starts // te, 0).astype(np.int32)
    max_steps = int(max(int(cnt.max()) if cnt.size else 0, 1))
    return order.astype(np.int32), src_pad, dst_pad, tile_lo, cnt, max_steps


# --------------------------------------------------------------------------- #
# Padded pallas_call wrapper
# --------------------------------------------------------------------------- #
@functools.partial(jax.jit, static_argnames=("tn", "te", "max_steps"))
def _gine_pallas(eps, x, edge_feat, perm, src_pad, dst_pad, tile_lo, cnt,
                 w0, b0, w1, b1, wa, ba, wb, bb, *, tn, te, max_steps):
    f32 = jnp.float32
    bf16 = jnp.bfloat16
    n, d = x.shape
    _, fe = edge_feat.shape
    e_pad = src_pad.shape[0]
    n_pad = _round_up(n, tn)
    d_pad = _round_up(d, LANE)
    h_pad = _round_up(wa.shape[1], LANE)
    d_out = wb.shape[1]
    do_pad = _round_up(d_out, LANE)

    def padto(a, rows, cols, dtype):
        a = a.astype(dtype)
        return jnp.pad(a, ((0, rows - a.shape[0]), (0, cols - a.shape[1])))

    # node / edge data.  Output-facing dims are lane-padded; the edge-feature
    # stream keeps its native width (block dim == full array dim is legal).
    x_p = padto(x, n_pad, d_pad, f32)                         # [N_pad, D_pad]   f32
    ef_p = padto(edge_feat[perm], e_pad, fe, bf16)            # [E_pad, fe]      bf16 (dst-sorted)
    # TODO(synk): replace this host-side gather with an in-kernel DMA gather so
    # the duplicated [E, D] source-row stream never touches HBM.
    xsrc_p = padto(x.astype(bf16)[src_pad], e_pad, d_pad, bf16)  # [E_pad, D_pad] bf16
    dst_row = dst_pad.reshape(1, e_pad).astype(jnp.int32)     # lane-dense [1, E_pad]
    eps_s = eps.reshape(1, 1).astype(f32)                     # SMEM scalar

    # weights (bf16 MXU operands), biases f32; zero padding is exact here.
    w0_p = padto(w0, fe, fe, bf16);        b0_p = padto(b0, 1, fe, f32)
    w1_p = padto(w1, fe, d_pad, bf16);     b1_p = padto(b1, 1, d_pad, f32)
    wa_p = padto(wa, d_pad, h_pad, bf16);  ba_p = padto(ba, 1, h_pad, f32)
    wb_p = padto(wb, h_pad, do_pad, bf16); bb_p = padto(bb, 1, do_pad, f32)

    num_nt = n_pad // tn
    grid = (num_nt, max_steps)

    def node_map(i, j, lo_ref, cnt_ref):
        return (i, 0)

    def const_map(i, j, lo_ref, cnt_ref):
        return (0, 0)

    def edge_row_map(i, j, lo_ref, cnt_ref):
        c = cnt_ref[i]
        jj = jnp.where(c > 0, jnp.minimum(j, c - 1), 0)
        return (lo_ref[i] + jj, 0)

    def edge_col_map(i, j, lo_ref, cnt_ref):
        c = cnt_ref[i]
        jj = jnp.where(c > 0, jnp.minimum(j, c - 1), 0)
        return (0, lo_ref[i] + jj)

    flops = (2 * e_pad * fe * (fe + d_pad)                   # edge MLP
             + 2 * e_pad * tn * d_pad                        # segment-sum scatter
             + 2 * n_pad * d_pad * h_pad                     # apply_func layer 1
             + 2 * n_pad * h_pad * do_pad)                   # apply_func layer 2
    bytes_accessed = (4 * (x_p.size + dst_row.size + n_pad * do_pad)
                      + 2 * (xsrc_p.size + ef_p.size
                             + w0_p.size + w1_p.size + wa_p.size + wb_p.size))

    out_p = pl.pallas_call(
        gine_kernel,
        out_shape=jax.ShapeDtypeStruct((n_pad, do_pad), f32),
        grid_spec=pltpu.PrefetchScalarGridSpec(
            num_scalar_prefetch=2,
            grid=grid,
            in_specs=[
                pl.BlockSpec(memory_space=pltpu.MemorySpace.SMEM),  # eps scalar
                pl.BlockSpec((tn, d_pad), node_map),         # x         (node tile, f32)
                pl.BlockSpec((te, d_pad), edge_row_map),     # x[src]    (edge tile, bf16)
                pl.BlockSpec((te, fe), edge_row_map),        # edge_feat (edge tile, bf16)
                pl.BlockSpec((1, te), edge_col_map),         # dst ids   (lane-dense row)
                pl.BlockSpec((fe, fe), const_map),           # W0
                pl.BlockSpec((1, fe), const_map),            # b0
                pl.BlockSpec((fe, d_pad), const_map),        # W1
                pl.BlockSpec((1, d_pad), const_map),         # b1
                pl.BlockSpec((d_pad, h_pad), const_map),     # Wa
                pl.BlockSpec((1, h_pad), const_map),         # ba
                pl.BlockSpec((h_pad, do_pad), const_map),    # Wb
                pl.BlockSpec((1, do_pad), const_map),        # bb
            ],
            out_specs=pl.BlockSpec((tn, do_pad), node_map),
            scratch_shapes=[pltpu.VMEM((tn, d_pad), f32)],
        ),
        compiler_params=pltpu.CompilerParams(
            dimension_semantics=("parallel", "arbitrary"),
            vmem_limit_bytes=32 * 1024 * 1024),
        cost_estimate=pl.CostEstimate(flops=int(flops), transcendentals=0,
                                      bytes_accessed=int(bytes_accessed)),
    )(jnp.asarray(tile_lo), jnp.asarray(cnt),
      eps_s, x_p, xsrc_p, ef_p, dst_row,
      w0_p, b0_p, w1_p, b1_p, wa_p, ba_p, wb_p, bb_p)

    return out_p[:n, :d_out]


def gine_forward(eps, x, edge_feat, src, dst,
                 w0, b0, w1, b1, wa, ba, wb, bb, *, tn=256, te=512):
    n = x.shape[0]
    e = len(src)
    # Keep >= 2 node tiles when the graph is small so the "parallel" node axis
    # can still shard across v7x's two TensorCores.
    if _round_up(n, tn) // tn < 2:
        tn = max(8, _round_up((n + 1) // 2, 8))
    # No point in edge tiles much larger than the edge count; keep te a
    # multiple of 128 (lane-dense dst block).
    te = max(128, min(te, _round_up(max(e, 1), 128)))

    perm, src_pad, dst_pad, tile_lo, cnt, max_steps = _prepare_graph(
        src, dst, n, tn, te)
    return _gine_pallas(eps, x, edge_feat,
                        jnp.asarray(perm), jnp.asarray(src_pad), jnp.asarray(dst_pad),
                        jnp.asarray(tile_lo), jnp.asarray(cnt),
                        w0, b0, w1, b1, wa, ba, wb, bb,
                        tn=tn, te=te, max_steps=max_steps)


# --------------------------------------------------------------------------- #
# Pure-JAX reference (f32)
# --------------------------------------------------------------------------- #
def _reference(eps, x, edge_feat, src, dst, w0, b0, w1, b1, wa, ba, wb, bb):
    ef0 = jnp.maximum(edge_feat @ w0 + b0, 0.0)
    eft = jnp.maximum(ef0 @ w1 + b1, 0.0)
    m = jnp.maximum(x[src] + eft, 0.0)
    neigh = jnp.zeros_like(x).at[dst].add(m)
    rst = (1.0 + eps[0]) * x + neigh
    h = jnp.maximum(rst @ wa + ba, 0.0)
    return h @ wb + bb


if __name__ == "__main__":
    # Small deterministic problem.
    N, E = 128, 512        # nodes, edges
    EDGE_DIM = 16          # edge feature dim
    D = 32                 # in_channels (node feature dim)
    H = 64                 # hidden dim of apply_func MLP
    D_OUT = 32             # output dim of apply_func

    key = jax.random.PRNGKey(0)
    ks = jax.random.split(key, 12)

    x = jax.random.normal(ks[0], (N, D), jnp.float32)
    edge_feat = jax.random.normal(ks[1], (E, EDGE_DIM), jnp.float32)
    src = jax.random.randint(ks[2], (E,), 0, N)
    dst = jax.random.randint(ks[3], (E,), 0, N)

    # Deterministic parameter init (weights stored as [in, out]; biases as [1, out]).
    def init_linear(k, fan_in, fan_out):
        kw, kb = jax.random.split(k)
        lim = 1.0 / np.sqrt(fan_in)
        w = jax.random.uniform(kw, (fan_in, fan_out), jnp.float32, -lim, lim)
        b = jax.random.uniform(kb, (1, fan_out), jnp.float32, -lim, lim)
        return w, b

    w0, b0 = init_linear(ks[4], EDGE_DIM, EDGE_DIM)   # edge_transform0
    w1, b1 = init_linear(ks[5], EDGE_DIM, D)          # edge_transform
    wa, ba = init_linear(ks[6], D, H)                 # apply_func[0]
    wb, bb = init_linear(ks[7], H, D_OUT)             # apply_func[2]

    eps = jnp.array([0.0], jnp.float32)               # init_eps=0, not learned

    out = gine_forward(eps, x, edge_feat, src, dst,
                       w0, b0, w1, b1, wa, ba, wb, bb)
    out = jax.block_until_ready(out)

    ref = _reference(eps, x, edge_feat, src, dst, w0, b0, w1, b1, wa, ba, wb, bb)
    out_np = np.asarray(out, np.float32)
    ref_np = np.asarray(ref, np.float32)
    # bf16 MXU operands (f32 accumulation) -> compare with a bf16-appropriate
    # tolerance: relative L2 error, typically ~1e-3 here.
    rel_err = np.linalg.norm(out_np - ref_np) / max(np.linalg.norm(ref_np), 1e-12)
    assert rel_err < 2e-2, f"relative L2 error too large: {rel_err}"

    print("KERNEL_OK")
</pallas_src>

<mosaic_0001>
module attributes {stable_mosaic.version = 11 : i64} {
  func.func @gine_kernel(%arg0: i32, %arg1: i32, %arg2: memref<2xi32, #tpu.memory_space<smem>>, %arg3: memref<2xi32, #tpu.memory_space<smem>>, %arg4: memref<1x1xf32, #tpu.memory_space<smem>>, %arg5: memref<64x128xf32, #tpu.memory_space<vmem>>, %arg6: memref<512x128xbf16, #tpu.memory_space<vmem>>, %arg7: memref<512x16xbf16, #tpu.memory_space<vmem>>, %arg8: memref<1x512xi32, #tpu.memory_space<vmem>>, %arg9: memref<16x16xbf16, #tpu.memory_space<vmem>>, %arg10: memref<1x16xf32, #tpu.memory_space<vmem>>, %arg11: memref<16x128xbf16, #tpu.memory_space<vmem>>, %arg12: memref<1x128xf32, #tpu.memory_space<vmem>>, %arg13: memref<128x128xbf16, #tpu.memory_space<vmem>>, %arg14: memref<1x128xf32, #tpu.memory_space<vmem>>, %arg15: memref<128x128xbf16, #tpu.memory_space<vmem>>, %arg16: memref<1x128xf32, #tpu.memory_space<vmem>>, %arg17: memref<64x128xf32, #tpu.memory_space<vmem>>, %arg18: memref<64x128xf32, #tpu.memory_space<vmem>>) attributes {dimension_semantics = [#tpu.dimension_semantics<parallel>, #tpu.dimension_semantics<arbitrary>], iteration_bounds = array<i64: 2, 1>, scalar_prefetch = 2 : i64, scratch_operands = 1 : i64, tpu.core_type = #tpu.core_type<tc>, window_params = [{transform_indices = @transform_0, window_bounds = array<i64: 1, 1>}, {transform_indices = @transform_1, window_bounds = array<i64: 64, 128>}, {transform_indices = @transform_2, window_bounds = array<i64: 512, 128>}, {transform_indices = @transform_3, window_bounds = array<i64: 512, 16>}, {transform_indices = @transform_4, window_bounds = array<i64: 1, 512>}, {pipeline_mode = #tpu.pipeline_mode<synchronous>, transform_indices = @transform_5, window_bounds = array<i64: 16, 16>}, {pipeline_mode = #tpu.pipeline_mode<synchronous>, transform_indices = @transform_6, window_bounds = array<i64: 1, 16>}, {pipeline_mode = #tpu.pipeline_mode<synchronous>, transform_indices = @transform_7, window_bounds = array<i64: 16, 128>}, {pipeline_mode = #tpu.pipeline_mode<synchronous>, transform_indices = @transform_8, window_bounds = array<i64: 1, 128>}, {pipeline_mode = #tpu.pipeline_mode<synchronous>, transform_indices = @transform_9, window_bounds = array<i64: 128, 128>}, {pipeline_mode = #tpu.pipeline_mode<synchronous>, transform_indices = @transform_10, window_bounds = array<i64: 1, 128>}, {pipeline_mode = #tpu.pipeline_mode<synchronous>, transform_indices = @transform_11, window_bounds = array<i64: 128, 128>}, {pipeline_mode = #tpu.pipeline_mode<synchronous>, transform_indices = @transform_12, window_bounds = array<i64: 1, 128>}, {transform_indices = @transform_13, window_bounds = array<i64: 64, 128>}]} {
    %c0_i32 = arith.constant 0 : i32
    %0 = arith.cmpi eq, %arg1, %c0_i32 : i32
    %1 = arith.extui %0 : i1 to i32
    %c0_i32_0 = arith.constant 0 : i32
    %2 = arith.cmpi ne, %1, %c0_i32_0 : i32
    scf.if %2 {
      %cst = arith.constant 0.000000e+00 : f32
      %11 = vector.broadcast %cst : f32 to vector<64x128xf32>
      %c0 = arith.constant 0 : index
      %c0_4 = arith.constant 0 : index
      %12 = vector.load %arg18[%c0, %c0_4] : memref<64x128xf32, #tpu.memory_space<vmem>>, vector<64x128xf32>
      tpu.vector_store %arg18[%c0, %c0_4], %11 {strides = array<i32>} : memref<64x128xf32, #tpu.memory_space<vmem>>, vector<64x128xf32>,
    } else {
    }
    %3 = arith.index_cast %arg0 : i32 to index
    %4 = memref.load %arg3[%3] : memref<2xi32, #tpu.memory_space<smem>>
    %5 = arith.cmpi slt, %arg1, %4 : i32
    %6 = arith.extui %5 : i1 to i32
    %c0_i32_1 = arith.constant 0 : i32
    %7 = arith.cmpi ne, %6, %c0_i32_1 : i32
    scf.if %7 {
      %c0 = arith.constant 0 : index
      %c0_4 = arith.constant 0 : index
      %11 = vector.load %arg7[%c0, %c0_4] : memref<512x16xbf16, #tpu.memory_space<vmem>>, vector<512x16xbf16>
      %c0_5 = arith.constant 0 : index
      %c0_6 = arith.constant 0 : index
      %12 = vector.load %arg9[%c0_5, %c0_6] : memref<16x16xbf16, #tpu.memory_space<vmem>>, vector<16x16xbf16>
      %cst = arith.constant dense<0.000000e+00> : vector<512x16xf32>
      %13 = tpu.matmul %11, %12, %cst {dimension_numbers = #tpu.dot_dimension_numbers<[1], [0], [0], [1], [0, 0, 1, 1], [], []>} : vector<512x16xbf16>, vector<16x16xbf16>, vector<512x16xf32> -> vector<512x16xf32>
      %c0_7 = arith.constant 0 : index
      %c0_8 = arith.constant 0 : index
      %14 = vector.load %arg10[%c0_7, %c0_8] : memref<1x16xf32, #tpu.memory_space<vmem>>, vector<1x16xf32>
      %15 = vector.broadcast %14 : vector<1x16xf32> to vector<512x16xf32>
      %16 = arith.addf %13, %15 : vector<512x16xf32>
      %cst_9 = arith.constant 0.000000e+00 : f32
      %17 = vector.broadcast %cst_9 : f32 to vector<512x16xf32>
      %18 = arith.maximumf %16, %17 : vector<512x16xf32>
      %19 = arith.truncf %18 : vector<512x16xf32> to vector<512x16xbf16>
      %c0_10 = arith.constant 0 : index
      %c0_11 = arith.constant 0 : index
      %20 = vector.load %arg11[%c0_10, %c0_11] : memref<16x128xbf16, #tpu.memory_space<vmem>>, vector<16x128xbf16>
      %cst_12 = arith.constant dense<0.000000e+00> : vector<512x128xf32>
      %21 = tpu.matmul %19, %20, %cst_12 {dimension_numbers = #tpu.dot_dimension_numbers<[1], [0], [0], [1], [0, 0, 1, 1], [], []>} : vector<512x16xbf16>, vector<16x128xbf16>, vector<512x128xf32> -> vector<512x128xf32>
      %c0_13 = arith.constant 0 : index
      %c0_14 = arith.constant 0 : index
      %22 = vector.load %arg12[%c0_13, %c0_14] : memref<1x128xf32, #tpu.memory_space<vmem>>, vector<1x128xf32>
      %23 = vector.broadcast %22 : vector<1x128xf32> to vector<512x128xf32>
      %24 = arith.addf %21, %23 : vector<512x128xf32>
      %cst_15 = arith.constant 0.000000e+00 : f32
      %25 = vector.broadcast %cst_15 : f32 to vector<512x128xf32>
      %26 = arith.maximumf %24, %25 : vector<512x128xf32>
      %c0_16 = arith.constant 0 : index
      %c0_17 = arith.constant 0 : index
      %27 = vector.load %arg6[%c0_16, %c0_17] : memref<512x128xbf16, #tpu.memory_space<vmem>>, vector<512x128xbf16>
      %28 = arith.extf %27 : vector<512x128xbf16> to vector<512x128xf32>
      %29 = arith.addf %28, %26 : vector<512x128xf32>
      %cst_18 = arith.constant 0.000000e+00 : f32
      %30 = vector.broadcast %cst_18 : f32 to vector<512x128xf32>
      %31 = arith.maximumf %29, %30 : vector<512x128xf32>
      %c64_i32 = arith.constant 64 : i32
      %32 = arith.muli %arg0, %c64_i32 : i32
      %33 = tpu.iota {dimensions = array<i32: 0>} : vector<64x512xi32>
      %34 = vector.broadcast %32 : i32 to vector<64x512xi32>
      %35 = arith.addi %34, %33 : vector<64x512xi32>
      %c0_19 = arith.constant 0 : index
      %c0_20 = arith.constant 0 : index
      %36 = vector.load %arg8[%c0_19, %c0_20] : memref<1x512xi32, #tpu.memory_space<vmem>>, vector<1x512xi32>
      %37 = vector.broadcast %36 : vector<1x512xi32> to vector<64x512xi32>
      %38 = arith.cmpi eq, %37, %35 : vector<64x512xi32>
      %39 = arith.extui %38 : vector<64x512xi1> to vector<64x512xi32>
      %40 = arith.sitofp %39 : vector<64x512xi32> to vector<64x512xf32>
      %41 = arith.truncf %40 : vector<64x512xf32> to vector<64x512xbf16>
      %c0_21 = arith.constant 0 : index
      %c0_22 = arith.constant 0 : index
      %42 = vector.load %arg18[%c0_21, %c0_22] : memref<64x128xf32, #tpu.memory_space<vmem>>, vector<64x128xf32>
      %43 = arith.truncf %31 : vector<512x128xf32> to vector<512x128xbf16>
      %cst_23 = arith.constant dense<0.000000e+00> : vector<64x128xf32>
      %44 = tpu.matmul %41, %43, %cst_23 {dimension_numbers = #tpu.dot_dimension_numbers<[1], [0], [0], [1], [0, 0, 1, 1], [], []>} : vector<64x512xbf16>, vector<512x128xbf16>, vector<64x128xf32> -> vector<64x128xf32>
      %45 = arith.addf %42, %44 : vector<64x128xf32>
      %c0_24 = arith.constant 0 : index
      %c0_25 = arith.constant 0 : index
      %46 = vector.load %arg18[%c0_24, %c0_25] : memref<64x128xf32, #tpu.memory_space<vmem>>, vector<64x128xf32>
      tpu.vector_store %arg18[%c0_24, %c0_25], %45 {strides = array<i32>} : memref<64x128xf32, #tpu.memory_space<vmem>>, vector<64x128xf32>,
    } else {
    }
    %c0_i32_2 = arith.constant 0 : i32
    %8 = arith.cmpi eq, %arg1, %c0_i32_2 : i32
    %9 = arith.extui %8 : i1 to i32
    %c0_i32_3 = arith.constant 0 : i32
    %10 = arith.cmpi ne, %9, %c0_i32_3 : i32
    scf.if %10 {
      %c0 = arith.constant 0 : index
      %c0_4 = arith.constant 0 : index
      %11 = memref.load %arg4[%c0, %c0_4] : memref<1x1xf32, #tpu.memory_space<smem>>
      %cst = arith.constant 1.000000e+00 : f32
      %12 = arith.addf %cst, %11 : f32
      %c0_5 = arith.constant 0 : index
      %c0_6 = arith.constant 0 : index
      %13 = vector.load %arg5[%c0_5, %c0_6] : memref<64x128xf32, #tpu.memory_space<vmem>>, vector<64x128xf32>
      %14 = vector.broadcast %12 : f32 to vector<64x128xf32>
      %15 = arith.mulf %14, %13 : vector<64x128xf32>
      %c0_7 = arith.constant 0 : index
      %c0_8 = arith.constant 0 : index
      %16 = vector.load %arg18[%c0_7, %c0_8] : memref<64x128xf32, #tpu.memory_space<vmem>>, vector<64x128xf32>
      %17 = arith.addf %15, %16 : vector<64x128xf32>
      %18 = arith.truncf %17 : vector<64x128xf32> to vector<64x128xbf16>
      %c0_9 = arith.constant 0 : index
      %c0_10 = arith.constant 0 : index
      %19 = vector.load %arg13[%c0_9, %c0_10] : memref<128x128xbf16, #tpu.memory_space<vmem>>, vector<128x128xbf16>
      %cst_11 = arith.constant dense<0.000000e+00> : vector<64x128xf32>
      %20 = tpu.matmul %18, %19, %cst_11 {dimension_numbers = #tpu.dot_dimension_numbers<[1], [0], [0], [1], [0, 0, 1, 1], [], []>} : vector<64x128xbf16>, vector<128x128xbf16>, vector<64x128xf32> -> vector<64x128xf32>
      %c0_12 = arith.constant 0 : index
      %c0_13 = arith.constant 0 : index
      %21 = vector.load %arg14[%c0_12, %c0_13] : memref<1x128xf32, #tpu.memory_space<vmem>>, vector<1x128xf32>
      %22 = vector.broadcast %21 : vector<1x128xf32> to vector<64x128xf32>
      %23 = arith.addf %20, %22 : vector<64x128xf32>
      %cst_14 = arith.constant 0.000000e+00 : f32
      %24 = vector.broadcast %cst_14 : f32 to vector<64x128xf32>
      %25 = arith.maximumf %23, %24 : vector<64x128xf32>
      %26 = arith.truncf %25 : vector<64x128xf32> to vector<64x128xbf16>
      %c0_15 = arith.constant 0 : index
      %c0_16 = arith.constant 0 : index
      %27 = vector.load %arg15[%c0_15, %c0_16] : memref<128x128xbf16, #tpu.memory_space<vmem>>, vector<128x128xbf16>
      %cst_17 = arith.constant dense<0.000000e+00> : vector<64x128xf32>
      %28 = tpu.matmul %26, %27, %cst_17 {dimension_numbers = #tpu.dot_dimension_numbers<[1], [0], [0], [1], [0, 0, 1, 1], [], []>} : vector<64x128xbf16>, vector<128x128xbf16>, vector<64x128xf32> -> vector<64x128xf32>
      %c0_18 = arith.constant 0 : index
      %c0_19 = arith.constant 0 : index
      %29 = vector.load %arg16[%c0_18, %c0_19] : memref<1x128xf32, #tpu.memory_space<vmem>>, vector<1x128xf32>
      %30 = vector.broadcast %29 : vector<1x128xf32> to vector<64x128xf32>
      %31 = arith.addf %28, %30 : vector<64x128xf32>
      %c0_20 = arith.constant 0 : index
      %c0_21 = arith.constant 0 : index
      %32 = vector.load %arg17[%c0_20, %c0_21] : memref<64x128xf32, #tpu.memory_space<vmem>>, vector<64x128xf32>
      tpu.vector_store %arg17[%c0_20, %c0_21], %31 {strides = array<i32>} : memref<64x128xf32, #tpu.memory_space<vmem>>, vector<64x128xf32>,
    } else {
    }
    return
  }
  func.func @transform_0(%arg0: i32, %arg1: i32, %arg2: memref<2xi32, #tpu.memory_space<smem>>, %arg3: memref<2xi32, #tpu.memory_space<smem>>) -> (i32, i32) {
    %c0_i32 = arith.constant 0 : i32
    %c0_i32_0 = arith.constant 0 : i32
    %c0_i32_1 = arith.constant 0 : i32
    return %c0_i32, %c0_i32_0 : i32, i32
  }
  func.func @transform_1(%arg0: i32, %arg1: i32, %arg2: memref<2xi32, #tpu.memory_space<smem>>, %arg3: memref<2xi32, #tpu.memory_space<smem>>) -> (i32, i32) {
    %c0_i32 = arith.constant 0 : i32
    %c0_i32_0 = arith.constant 0 : i32
    return %arg0, %c0_i32 : i32, i32
  }
  func.func @transform_2(%arg0: i32, %arg1: i32, %arg2: memref<2xi32, #tpu.memory_space<smem>>, %arg3: memref<2xi32, #tpu.memory_space<smem>>) -> (i32, i32) {
    %0 = arith.index_cast %arg0 : i32 to index
    %1 = memref.load %arg3[%0] : memref<2xi32, #tpu.memory_space<smem>>
    %c0_i32 = arith.constant 0 : i32
    %2 = arith.cmpi sgt, %1, %c0_i32 : i32
    %c1_i32 = arith.constant 1 : i32
    %3 = arith.subi %1, %c1_i32 : i32
    %4 = arith.minsi %arg1, %3 : i32
    %c0_i32_0 = arith.constant 0 : i32
    %5 = arith.select %2, %4, %c0_i32_0 : i32
    %6 = arith.index_cast %arg0 : i32 to index
    %7 = memref.load %arg2[%6] : memref<2xi32, #tpu.memory_space<smem>>
    %8 = arith.addi %7, %5 : i32
    %c0_i32_1 = arith.constant 0 : i32
    %c0_i32_2 = arith.constant 0 : i32
    return %8, %c0_i32_1 : i32, i32
  }
  func.func @transform_3(%arg0: i32, %arg1: i32, %arg2: memref<2xi32, #tpu.memory_space<smem>>, %arg3: memref<2xi32, #tpu.memory_space<smem>>) -> (i32, i32) {
    %0 = arith.index_cast %arg0 : i32 to index
    %1 = memref.load %arg3[%0] : memref<2xi32, #tpu.memory_space<smem>>
    %c0_i32 = arith.constant 0 : i32
    %2 = arith.cmpi sgt, %1, %c0_i32 : i32
    %c1_i32 = arith.constant 1 : i32
    %3 = arith.subi %1, %c1_i32 : i32
    %4 = arith.minsi %arg1, %3 : i32
    %c0_i32_0 = arith.constant 0 : i32
    %5 = arith.select %2, %4, %c0_i32_0 : i32
    %6 = arith.index_cast %arg0 : i32 to index
    %7 = memref.load %arg2[%6] : memref<2xi32, #tpu.memory_space<smem>>
    %8 = arith.addi %7, %5 : i32
    %c0_i32_1 = arith.constant 0 : i32
    %c0_i32_2 = arith.constant 0 : i32
    return %8, %c0_i32_1 : i32, i32
  }
  func.func @transform_4(%arg0: i32, %arg1: i32, %arg2: memref<2xi32, #tpu.memory_space<smem>>, %arg3: memref<2xi32, #tpu.memory_space<smem>>) -> (i32, i32) {
    %0 = arith.index_cast %arg0 : i32 to index
    %1 = memref.load %arg3[%0] : memref<2xi32, #tpu.memory_space<smem>>
    %c0_i32 = arith.constant 0 : i32
    %2 = arith.cmpi sgt, %1, %c0_i32 : i32
    %c1_i32 = arith.constant 1 : i32
    %3 = arith.subi %1, %c1_i32 : i32
    %4 = arith.minsi %arg1, %3 : i32
    %c0_i32_0 = arith.constant 0 : i32
    %5 = arith.select %2, %4, %c0_i32_0 : i32
    %6 = arith.index_cast %arg0 : i32 to index
    %7 = memref.load %arg2[%6] : memref<2xi32, #tpu.memory_space<smem>>
    %8 = arith.addi %7, %5 : i32
    %c0_i32_1 = arith.constant 0 : i32
    %c0_i32_2 = arith.constant 0 : i32
    return %c0_i32_1, %8 : i32, i32
  }
  func.func @transform_5(%arg0: i32, %arg1: i32, %arg2: memref<2xi32, #tpu.memory_space<smem>>, %arg3: memref<2xi32, #tpu.memory_space<smem>>) -> (i32, i32) {
    %c0_i32 = arith.constant 0 : i32
    %c0_i32_0 = arith.constant 0 : i32
    %c0_i32_1 = arith.constant 0 : i32
    return %c0_i32, %c0_i32_0 : i32, i32
  }
  func.func @transform_6(%arg0: i32, %arg1: i32, %arg2: memref<2xi32, #tpu.memory_space<smem>>, %arg3: memref<2xi32, #tpu.memory_space<smem>>) -> (i32, i32) {
    %c0_i32 = arith.constant 0 : i32
    %c0_i32_0 = arith.constant 0 : i32
    %c0_i32_1 = arith.constant 0 : i32
    return %c0_i32, %c0_i32_0 : i32, i32
  }
  func.func @transform_7(%arg0: i32, %arg1: i32, %arg2: memref<2xi32, #tpu.memory_space<smem>>, %arg3: memref<2xi32, #tpu.memory_space<smem>>) -> (i32, i32) {
    %c0_i32 = arith.constant 0 : i32
    %c0_i32_0 = arith.constant 0 : i32
    %c0_i32_1 = arith.constant 0 : i32
    return %c0_i32, %c0_i32_0 : i32, i32
  }
  func.func @transform_8(%arg0: i32, %arg1: i32, %arg2: memref<2xi32, #tpu.memory_space<smem>>, %arg3: memref<2xi32, #tpu.memory_space<smem>>) -> (i32, i32) {
    %c0_i32 = arith.constant 0 : i32
    %c0_i32_0 = arith.constant 0 : i32
    %c0_i32_1 = arith.constant 0 : i32
    return %c0_i32, %c0_i32_0 : i32, i32
  }
  func.func @transform_9(%arg0: i32, %arg1: i32, %arg2: memref<2xi32, #tpu.memory_space<smem>>, %arg3: memref<2xi32, #tpu.memory_space<smem>>) -> (i32, i32) {
    %c0_i32 = arith.constant 0 : i32
    %c0_i32_0 = arith.constant 0 : i32
    %c0_i32_1 = arith.constant 0 : i32
    return %c0_i32, %c0_i32_0 : i32, i32
  }
  func.func @transform_10(%arg0: i32, %arg1: i32, %arg2: memref<2xi32, #tpu.memory_space<smem>>, %arg3: memref<2xi32, #tpu.memory_space<smem>>) -> (i32, i32) {
    %c0_i32 = arith.constant 0 : i32
    %c0_i32_0 = arith.constant 0 : i32
    %c0_i32_1 = arith.constant 0 : i32
    return %c0_i32, %c0_i32_0 : i32, i32
  }
  func.func @transform_11(%arg0: i32, %arg1: i32, %arg2: memref<2xi32, #tpu.memory_space<smem>>, %arg3: memref<2xi32, #tpu.memory_space<smem>>) -> (i32, i32) {
    %c0_i32 = arith.constant 0 : i32
    %c0_i32_0 = arith.constant 0 : i32
    %c0_i32_1 = arith.constant 0 : i32
    return %c0_i32, %c0_i32_0 : i32, i32
  }
  func.func @transform_12(%arg0: i32, %arg1: i32, %arg2: memref<2xi32, #tpu.memory_space<smem>>, %arg3: memref<2xi32, #tpu.memory_space<smem>>) -> (i32, i32) {
    %c0_i32 = arith.constant 0 : i32
    %c0_i32_0 = arith.constant 0 : i32
    %c0_i32_1 = arith.constant 0 : i32
    return %c0_i32, %c0_i32_0 : i32, i32
  }
  func.func @transform_13(%arg0: i32, %arg1: i32, %arg2: memref<2xi32, #tpu.memory_space<smem>>, %arg3: memref<2xi32, #tpu.memory_space<smem>>) -> (i32, i32) {
    %c0_i32 = arith.constant 0 : i32
    %c0_i32_0 = arith.constant 0 : i32
    return %arg0, %c0_i32 : i32, i32
  }
}

</mosaic_0001>

<llo_original>
// kernel: _gine_pallas.1
$region0: #{_gine_pallas.1}
  #allocation0 [shape = 'u32[]', space=smem, size = 0x4, offset = 0x4, fixed_abs, tag = 'smem constant byte address 0x4 - core index']
  #allocation1 [shape = 'u32[144,128]{1,0:T(1,128)}', space=vmem, size = 0x12000, scoped, tag = 'internal scratch']
  #allocation2 [shape = 'f32[64,128]{1,0:T(8,128)}', space=vmem, size = 0x8000, scoped, tag = 'scratch operand']
  #allocation3 [shape = 's32[1]{0}', space=sflag, size = 0x4, scoped, tag = 'scoped memory for _gine_pallas.1']
  #allocation4 [shape = 'u8[512]{0}', space=smem, size = 0x200, scoped, tag = 'prefetched SMEM operand 0']
  #allocation5 [shape = 'u8[512]{0}', space=smem, size = 0x200, scoped, tag = 'prefetched SMEM operand 1']
  #allocation6 [shape = 'f32[1,1]{1,0:T(1,128)S(6)}', space=smem, size = 0x200, scoped, tag = 'scoped memory for _gine_pallas.1']
  %s0 = inlined_call_operand.vmem [shape: s32[2], index: 0, kind: input, shape index: {}]
  %s1 = inlined_call_operand.vmem [shape: s32[2], index: 1, kind: input, shape index: {}]
  %s2 = inlined_call_operand.<no memory space> [shape: f32[1,1], index: 2, kind: input, shape index: {}]
  %s3 = inlined_call_operand.vmem [shape: f32[128,128], index: 3, kind: input, shape index: {}]
  %s4 = inlined_call_operand.vmem [shape: bf16[512,128], index: 4, kind: input, shape index: {}]
  %s5 = inlined_call_operand.vmem [shape: bf16[512,16], index: 5, kind: input, shape index: {}]
  %s6 = inlined_call_operand.vmem [shape: s32[1,512], index: 6, kind: input, shape index: {}]
  %s7 = inlined_call_operand.vmem [shape: bf16[16,16], index: 7, kind: input, shape index: {}]
  %s8 = inlined_call_operand.vmem [shape: f32[1,16], index: 8, kind: input, shape index: {}]
  %s9 = inlined_call_operand.vmem [shape: bf16[16,128], index: 9, kind: input, shape index: {}]
  %s10 = inlined_call_operand.vmem [shape: f32[1,128], index: 10, kind: input, shape index: {}]
  %s11 = inlined_call_operand.vmem [shape: bf16[128,128], index: 11, kind: input, shape index: {}]
  %s12 = inlined_call_operand.vmem [shape: f32[1,128], index: 12, kind: input, shape index: {}]
  %s13 = inlined_call_operand.vmem [shape: bf16[128,128], index: 13, kind: input, shape index: {}]
  %s14 = inlined_call_operand.vmem [shape: f32[1,128], index: 14, kind: input, shape index: {}]
  %s15 = inlined_call_operand.vmem [shape: f32[128,128], index: 15, kind: output, shape index: {}]
  %s16 = sld [smem:[#allocation0]]
  $region97: #{_gine_pallas.1} parent=0
    _
  %s18 = ssub.s32 1, %s16
  %s19 = scalar_select 0, %s18, %s16
  %s20 = sshll.u32 %s0, 4
  %s21 = int_to_ptr.vmem [resolvable:$true] %s20
  %23 = dma.vmem_to_smem %s21, 16, [#allocation4], [#allocation3]
  %s24 = sshll.u32 %s1, 4
  %s25 = int_to_ptr.vmem [resolvable:$true] %s24
  %27 = dma.vmem_to_smem %s25, 16, [#allocation5], [#allocation3]
  %28 = sst [smem:[#allocation6]] %s2
  %29 = dma.done [#allocation3], 32
  %30 = sfence
  loop: start=0, step=1, limit=4
  $region2: #{_gine_pallas.1} parent=0 // loop_pre_header
    _
  $region3: #{_gine_pallas.1} parent=0 // loop_header
    %s32 = sphi 0, %s36
    %p33 = scmp.ge.s32.totalorder %s32, 4
    %s39 = sphi 0, %s51
    %s40 = sphi 0, %s47
    %s41 = sphi 0, %s39
    %s42 = sphi 0, %s40
    %s43 = sphi 0, %s41
    %s44 = sphi 0, %s42
    %s52 = sphi 0, %s52
    %s54 = sphi 0, %s52
    %s55 = sphi 0, %s54
    %s69 = sphi 0, %s55
    %s75 = sphi 0, %s77
    %s78 = sphi 0, %s75
    %s79 = sphi 0, %s78
    %s95 = sphi 0, %s79
    %s117 = sphi 0, %s119
    %s120 = sphi 0, %s117
    %s121 = sphi 0, %s120
    %s137 = sphi 0, %s121
    %s159 = sphi 0, %s161
    %s162 = sphi 0, %s159
    %s163 = sphi 0, %s162
    %s179 = sphi 0, %s163
    %s201 = sphi 0, %s203
    %s204 = sphi 0, %s201
    %s205 = sphi 0, %s204
    %s221 = sphi 0, %s205
    %s225 = sphi 0, %s225
    %s227 = sphi 0, %s225
    %s228 = sphi 0, %s227
    %s242 = sphi 0, %s228
    %s246 = sphi 0, %s246
    %s248 = sphi 0, %s246
    %s249 = sphi 0, %s248
    %s263 = sphi 0, %s249
    %s267 = sphi 0, %s267
    %s269 = sphi 0, %s267
    %s270 = sphi 0, %s269
    %s284 = sphi 0, %s270
    %s288 = sphi 0, %s288
    %s290 = sphi 0, %s288
    %s291 = sphi 0, %s290
    %s305 = sphi 0, %s291
    %s309 = sphi 0, %s309
    %s311 = sphi 0, %s309
    %s312 = sphi 0, %s311
    %s326 = sphi 0, %s312
    %s330 = sphi 0, %s330
    %s332 = sphi 0, %s330
    %s333 = sphi 0, %s332
    %s347 = sphi 0, %s333
    %s351 = sphi 0, %s351
    %s353 = sphi 0, %s351
    %s354 = sphi 0, %s353
    %s368 = sphi 0, %s354
    %s372 = sphi 0, %s372
    %s374 = sphi 0, %s372
    %s375 = sphi 0, %s374
    %s389 = sphi 0, %s375
    %s395 = sphi 0, %s397
    %s398 = sphi 0, %s395
    %s399 = sphi 0, %s398
    %s415 = sphi 0, %s399
  $region4: #{_gine_pallas.1} parent=0 // loop_header_branch
    %35 = sbr.rel (%p33) target = $region8
  $region5: #{_gine_pallas.1} parent=0 // loop_body
    %s37 = ssub.s32 %s32, 1
    %s38 = ssub.s32 %s32, 2
    %s45 = sadd.s32 1, %s40
    %p46 = scmp.ge.s32.totalorder %s45, 1
    %s47 = scalar_select %p46, 0, %s45
    %s48 = sadd.s32 1, %s39
    %s49 = scalar_select %p46, %s48, %s39
    %p50 = scmp.ge.s32.totalorder %s49, 2
    %s51 = scalar_select %p50, 0, %s49
    %s53 = sadd.s32 %s52, 1
    %p56 = scmp.eq.s32.totalorder %s32, 1
    %p57 = scmp.ne.s32.totalorder %s52, %s54
    %p58 = scmp.eq.s32.totalorder %s32, 0
    %p59 = por %p57, %p58
    %p60 = scmp.ne.s32.totalorder %s52, %s54
    %p61 = scmp.eq.s32.totalorder %s37, 1
    %p62 = por %p60, %p61
    %p63 = scmp.ne.s32.totalorder %s54, %s55
    %p64 = scmp.eq.s32.totalorder %s37, 0
    %p65 = por %p63, %p64
    %p66 = scmp.ne.s32.totalorder %s54, %s55
    %p67 = scmp.eq.s32.totalorder %s38, 1
    %p68 = por %p66, %p67
    %p70 = scmp.ne.s32.totalorder %s55, %s69
    %p71 = scmp.eq.s32.totalorder %s38, 0
    %p72 = por %p70, %p71
    %s73 = ssub.s32 %s39, %s51
    %p74 = scmp.eq.s32.totalorder %s73, 0
    %s76 = sadd.s32 %s75, 1
    %s77 = scalar_select %p74, %s75, %s76
    %p80 = pneg %p74
    %p81 = scmp.eq.s32.totalorder %s32, 1
    %p82 = por %p80, %p81
    %p83 = scmp.ne.s32.totalorder %s75, %s78
    %p84 = scmp.eq.s32.totalorder %s32, 0
    %p85 = por %p83, %p84
    %p86 = scmp.ne.s32.totalorder %s75, %s78
    %p87 = scmp.eq.s32.totalorder %s37, 1
    %p88 = por %p86, %p87
    %p89 = scmp.ne.s32.totalorder %s78, %s79
    %p90 = scmp.eq.s32.totalorder %s37, 0
    %p91 = por %p89, %p90
    %p92 = scmp.ne.s32.totalorder %s78, %s79
    %p93 = scmp.eq.s32.totalorder %s38, 1
    %p94 = por %p92, %p93
    %p96 = scmp.ne.s32.totalorder %s79, %s95
    %p97 = scmp.eq.s32.totalorder %s38, 0
    %p98 = por %p96, %p97
    %s99 = sld [smem:[#allocation5 + %s39]]
    %p100 = scmp.gt.s32.totalorder %s99, 0
    %s101 = ssub.s32 %s99, 1
    %p102 = scmp.lt.s32.totalorder %s40, %s101
    %s103 = scalar_select %p102, %s40, %s101
    %s104 = scalar_select %p100, %s103, 0
    %s105 = sld [smem:[#allocation4 + %s39]]
    %s106 = sadd.s32 %s105, %s104
    %s107 = sld [smem:[#allocation5 + %s51]]
    %p108 = scmp.gt.s32.totalorder %s107, 0
    %s109 = ssub.s32 %s107, 1
    %p110 = scmp.lt.s32.totalorder %s47, %s109
    %s111 = scalar_select %p110, %s47, %s109
    %s112 = scalar_select %p108, %s111, 0
    %s113 = sld [smem:[#allocation4 + %s51]]
    %s114 = sadd.s32 %s113, %s112
    %s115 = ssub.s32 %s106, %s114
    %p116 = scmp.eq.s32.totalorder %s115, 0
    %s118 = sadd.s32 %s117, 1
    %s119 = scalar_select %p116, %s117, %s118
    %p122 = pneg %p116
    %p123 = scmp.eq.s32.totalorder %s32, 1
    %p124 = por %p122, %p123
    %p125 = scmp.ne.s32.totalorder %s117, %s120
    %p126 = scmp.eq.s32.totalorder %s32, 0
    %p127 = por %p125, %p126
    %p128 = scmp.ne.s32.totalorder %s117, %s120
    %p129 = scmp.eq.s32.totalorder %s37, 1
    %p130 = por %p128, %p129
    %p131 = scmp.ne.s32.totalorder %s120, %s121
    %p132 = scmp.eq.s32.totalorder %s37, 0
    %p133 = por %p131, %p132
    %p134 = scmp.ne.s32.totalorder %s120, %s121
    %p135 = scmp.eq.s32.totalorder %s38, 1
    %p136 = por %p134, %p135
    %p138 = scmp.ne.s32.totalorder %s121, %s137
    %p139 = scmp.eq.s32.totalorder %s38, 0
    %p140 = por %p138, %p139
    %s141 = sld [smem:[#allocation5 + %s39]]
    %p142 = scmp.gt.s32.totalorder %s141, 0
    %s143 = ssub.s32 %s141, 1
    %p144 = scmp.lt.s32.totalorder %s40, %s143
    %s145 = scalar_select %p144, %s40, %s143
    %s146 = scalar_select %p142, %s145, 0
    %s147 = sld [smem:[#allocation4 + %s39]]
    %s148 = sadd.s32 %s147, %s146
    %s149 = sld [smem:[#allocation5 + %s51]]
    %p150 = scmp.gt.s32.totalorder %s149, 0
    %s151 = ssub.s32 %s149, 1
    %p152 = scmp.lt.s32.totalorder %s47, %s151
    %s153 = scalar_select %p152, %s47, %s151
    %s154 = scalar_select %p150, %s153, 0
    %s155 = sld [smem:[#allocation4 + %s51]]
    %s156 = sadd.s32 %s155, %s154
    %s157 = ssub.s32 %s148, %s156
    %p158 = scmp.eq.s32.totalorder %s157, 0
    %s160 = sadd.s32 %s159, 1
    %s161 = scalar_select %p158, %s159, %s160
    %p164 = pneg %p158
    %p165 = scmp.eq.s32.totalorder %s32, 1
    %p166 = por %p164, %p165
    %p167 = scmp.ne.s32.totalorder %s159, %s162
    %p168 = scmp.eq.s32.totalorder %s32, 0
    %p169 = por %p167, %p168
    %p170 = scmp.ne.s32.totalorder %s159, %s162
    %p171 = scmp.eq.s32.totalorder %s37, 1
    %p172 = por %p170, %p171
    %p173 = scmp.ne.s32.totalorder %s162, %s163
    %p174 = scmp.eq.s32.totalorder %s37, 0
    %p175 = por %p173, %p174
    %p176 = scmp.ne.s32.totalorder %s162, %s163
    %p177 = scmp.eq.s32.totalorder %s38, 1
    %p178 = por %p176, %p177
    %p180 = scmp.ne.s32.totalorder %s163, %s179
    %p181 = scmp.eq.s32.totalorder %s38, 0
    %p182 = por %p180, %p181
    %s183 = sld [smem:[#allocation5 + %s39]]
    %p184 = scmp.gt.s32.totalorder %s183, 0
    %s185 = ssub.s32 %s183, 1
    %p186 = scmp.lt.s32.totalorder %s40, %s185
    %s187 = scalar_select %p186, %s40, %s185
    %s188 = scalar_select %p184, %s187, 0
    %s189 = sld [smem:[#allocation4 + %s39]]
    %s190 = sadd.s32 %s189, %s188
    %s191 = sld [smem:[#allocation5 + %s51]]
    %p192 = scmp.gt.s32.totalorder %s191, 0
    %s193 = ssub.s32 %s191, 1
    %p194 = scmp.lt.s32.totalorder %s47, %s193
    %s195 = scalar_select %p194, %s47, %s193
    %s196 = scalar_select %p192, %s195, 0
    %s197 = sld [smem:[#allocation4 + %s51]]
    %s198 = sadd.s32 %s197, %s196
    %s199 = ssub.s32 %s190, %s198
    %p200 = scmp.eq.s32.totalorder %s199, 0
    %s202 = sadd.s32 %s201, 1
    %s203 = scalar_select %p200, %s201, %s202
    %p206 = pneg %p200
    %p207 = scmp.eq.s32.totalorder %s32, 1
    %p208 = por %p206, %p207
    %p209 = scmp.ne.s32.totalorder %s201, %s204
    %p210 = scmp.eq.s32.totalorder %s32, 0
    %p211 = por %p209, %p210
    %p212 = scmp.ne.s32.totalorder %s201, %s204
    %p213 = scmp.eq.s32.totalorder %s37, 1
    %p214 = por %p212, %p213
    %p215 = scmp.ne.s32.totalorder %s204, %s205
    %p216 = scmp.eq.s32.totalorder %s37, 0
    %p217 = por %p215, %p216
    %p218 = scmp.ne.s32.totalorder %s204, %s205
    %p219 = scmp.eq.s32.totalorder %s38, 1
    %p220 = por %p218, %p219
    %p222 = scmp.ne.s32.totalorder %s205, %s221
    %p223 = scmp.eq.s32.totalorder %s38, 0
    %p224 = por %p222, %p223
    %s226 = sadd.s32 %s225, 1
    %p229 = scmp.eq.s32.totalorder %s32, 1
    %p230 = scmp.ne.s32.totalorder %s225, %s227
    %p231 = scmp.eq.s32.totalorder %s32, 0
    %p232 = por %p230, %p231
    %p233 = scmp.ne.s32.totalorder %s225, %s227
    %p234 = scmp.eq.s32.totalorder %s37, 1
    %p235 = por %p233, %p234
    %p236 = scmp.ne.s32.totalorder %s227, %s228
    %p237 = scmp.eq.s32.totalorder %s37, 0
    %p238 = por %p236, %p237
    %p239 = scmp.ne.s32.totalorder %s227, %s228
    %p240 = scmp.eq.s32.totalorder %s38, 1
    %p241 = por %p239, %p240
    %p243 = scmp.ne.s32.totalorder %s228, %s242
    %p244 = scmp.eq.s32.totalorder %s38, 0
    %p245 = por %p243, %p244
    %s247 = sadd.s32 %s246, 1
    %p250 = scmp.eq.s32.totalorder %s32, 1
    %p251 = scmp.ne.s32.totalorder %s246, %s248
    %p252 = scmp.eq.s32.totalorder %s32, 0
    %p253 = por %p251, %p252
    %p254 = scmp.ne.s32.totalorder %s246, %s248
    %p255 = scmp.eq.s32.totalorder %s37, 1
    %p256 = por %p254, %p255
    %p257 = scmp.ne.s32.totalorder %s248, %s249
    %p258 = scmp.eq.s32.totalorder %s37, 0
    %p259 = por %p257, %p258
    %p260 = scmp.ne.s32.totalorder %s248, %s249
    %p261 = scmp.eq.s32.totalorder %s38, 1
    %p262 = por %p260, %p261
    %p264 = scmp.ne.s32.totalorder %s249, %s263
    %p265 = scmp.eq.s32.totalorder %s38, 0
    %p266 = por %p264, %p265
    %s268 = sadd.s32 %s267, 1
    %p271 = scmp.eq.s32.totalorder %s32, 1
    %p272 = scmp.ne.s32.totalorder %s267, %s269
    %p273 = scmp.eq.s32.totalorder %s32, 0
    %p274 = por %p272, %p273
    %p275 = scmp.ne.s32.totalorder %s267, %s269
    %p276 = scmp.eq.s32.totalorder %s37, 1
    %p277 = por %p275, %p276
    %p278 = scmp.ne.s32.totalorder %s269, %s270
    %p279 = scmp.eq.s32.totalorder %s37, 0
    %p280 = por %p278, %p279
    %p281 = scmp.ne.s32.totalorder %s269, %s270
    %p282 = scmp.eq.s32.totalorder %s38, 1
    %p283 = por %p281, %p282
    %p285 = scmp.ne.s32.totalorder %s270, %s284
    %p286 = scmp.eq.s32.totalorder %s38, 0
    %p287 = por %p285, %p286
    %s289 = sadd.s32 %s288, 1
    %p292 = scmp.eq.s32.totalorder %s32, 1
    %p293 = scmp.ne.s32.totalorder %s288, %s290
    %p294 = scmp.eq.s32.totalorder %s32, 0
    %p295 = por %p293, %p294
    %p296 = scmp.ne.s32.totalorder %s288, %s290
    %p297 = scmp.eq.s32.totalorder %s37, 1
    %p298 = por %p296, %p297
    %p299 = scmp.ne.s32.totalorder %s290, %s291
    %p300 = scmp.eq.s32.totalorder %s37, 0
    %p301 = por %p299, %p300
    %p302 = scmp.ne.s32.totalorder %s290, %s291
    %p303 = scmp.eq.s32.totalorder %s38, 1
    %p304 = por %p302, %p303
    %p306 = scmp.ne.s32.totalorder %s291, %s305
    %p307 = scmp.eq.s32.totalorder %s38, 0
    %p308 = por %p306, %p307
    %s310 = sadd.s32 %s309, 1
    %p313 = scmp.eq.s32.totalorder %s32, 1
    %p314 = scmp.ne.s32.totalorder %s309, %s311
    %p315 = scmp.eq.s32.totalorder %s32, 0
    %p316 = por %p314, %p315
    %p317 = scmp.ne.s32.totalorder %s309, %s311
    %p318 = scmp.eq.s32.totalorder %s37, 1
    %p319 = por %p317, %p318
    %p320 = scmp.ne.s32.totalorder %s311, %s312
    %p321 = scmp.eq.s32.totalorder %s37, 0
    %p322 = por %p320, %p321
    %p323 = scmp.ne.s32.totalorder %s311, %s312
    %p324 = scmp.eq.s32.totalorder %s38, 1
    %p325 = por %p323, %p324
    %p327 = scmp.ne.s32.totalorder %s312, %s326
    %p328 = scmp.eq.s32.totalorder %s38, 0
    %p329 = por %p327, %p328
    %s331 = sadd.s32 %s330, 1
    %p334 = scmp.eq.s32.totalorder %s32, 1
    %p335 = scmp.ne.s32.totalorder %s330, %s332
    %p336 = scmp.eq.s32.totalorder %s32, 0
    %p337 = por %p335, %p336
    %p338 = scmp.ne.s32.totalorder %s330, %s332
    %p339 = scmp.eq.s32.totalorder %s37, 1
    %p340 = por %p338, %p339
    %p341 = scmp.ne.s32.totalorder %s332, %s333
    %p342 = scmp.eq.s32.totalorder %s37, 0
    %p343 = por %p341, %p342
    %p344 = scmp.ne.s32.totalorder %s332, %s333
    %p345 = scmp.eq.s32.totalorder %s38, 1
    %p346 = por %p344, %p345
    %p348 = scmp.ne.s32.totalorder %s333, %s347
    %p349 = scmp.eq.s32.totalorder %s38, 0
    %p350 = por %p348, %p349
    %s352 = sadd.s32 %s351, 1
    %p355 = scmp.eq.s32.totalorder %s32, 1
    %p356 = scmp.ne.s32.totalorder %s351, %s353
    %p357 = scmp.eq.s32.totalorder %s32, 0
    %p358 = por %p356, %p357
    %p359 = scmp.ne.s32.totalorder %s351, %s353
    %p360 = scmp.eq.s32.totalorder %s37, 1
    %p361 = por %p359, %p360
    %p362 = scmp.ne.s32.totalorder %s353, %s354
    %p363 = scmp.eq.s32.totalorder %s37, 0
    %p364 = por %p362, %p363
    %p365 = scmp.ne.s32.totalorder %s353, %s354
    %p366 = scmp.eq.s32.totalorder %s38, 1
    %p367 = por %p365, %p366
    %p369 = scmp.ne.s32.totalorder %s354, %s368
    %p370 = scmp.eq.s32.totalorder %s38, 0
    %p371 = por %p369, %p370
    %s373 = sadd.s32 %s372, 1
    %p376 = scmp.eq.s32.totalorder %s32, 1
    %p377 = scmp.ne.s32.totalorder %s372, %s374
    %p378 = scmp.eq.s32.totalorder %s32, 0
    %p379 = por %p377, %p378
    %p380 = scmp.ne.s32.totalorder %s372, %s374
    %p381 = scmp.eq.s32.totalorder %s37, 1
    %p382 = por %p380, %p381
    %p383 = scmp.ne.s32.totalorder %s374, %s375
    %p384 = scmp.eq.s32.totalorder %s37, 0
    %p385 = por %p383, %p384
    %p386 = scmp.ne.s32.totalorder %s374, %s375
    %p387 = scmp.eq.s32.totalorder %s38, 1
    %p388 = por %p386, %p387
    %p390 = scmp.ne.s32.totalorder %s375, %s389
    %p391 = scmp.eq.s32.totalorder %s38, 0
    %p392 = por %p390, %p391
    %s393 = ssub.s32 %s39, %s51
    %p394 = scmp.eq.s32.totalorder %s393, 0
    %s396 = sadd.s32 %s395, 1
    %s397 = scalar_select %p394, %s395, %s396
    %p400 = pneg %p394
    %p401 = scmp.eq.s32.totalorder %s32, 1
    %p402 = por %p400, %p401
    %p403 = scmp.ne.s32.totalorder %s395, %s398
    %p404 = scmp.eq.s32.totalorder %s32, 0
    %p405 = por %p403, %p404
    %p406 = scmp.ne.s32.totalorder %s395, %s398
    %p407 = scmp.eq.s32.totalorder %s37, 1
    %p408 = por %p406, %p407
    %p409 = scmp.ne.s32.totalorder %s398, %s399
    %p410 = scmp.eq.s32.totalorder %s37, 0
    %p411 = por %p409, %p410
    %p412 = scmp.ne.s32.totalorder %s398, %s399
    %p413 = scmp.eq.s32.totalorder %s38, 1
    %p414 = por %p412, %p413
    %p416 = scmp.ne.s32.totalorder %s399, %s415
    %p417 = scmp.eq.s32.totalorder %s38, 0
    %p418 = por %p416, %p417
    %p419 = scmp.le.s32.totalorder 1, %s32
    %p420 = scmp.lt.s32.totalorder %s32, 3
    %p421 = pnand %p419, %p420
    %p422 = pneg %p421
    // Predicated region
    $region9: #{_gine_pallas.1} parent=5 // pred_check
      _
    $region10: #{_gine_pallas.1} parent=5 // pred_check_branch
      %424 = sbr.rel (%p421) target = $region12
    $region11: #{_gine_pallas.1} parent=5 // pred_region
      %s425 = ssub.s32 %s32, 1
      // Predicated region
      $region13: #{_gine_pallas.1} parent=11 // pred_check
        %p426 = pneg %p65
      $region14: #{_gine_pallas.1} parent=11 // pred_check_branch
        %428 = sbr.rel (%p426) target = $region16
      $region15: #{_gine_pallas.1} parent=11 // pred_region
        _
      $region16: #{_gine_pallas.1} parent=11 // pred_fallthru
        _
      // Predicated region
      $region17: #{_gine_pallas.1} parent=11 // pred_check
        %p429 = pneg %p238
      $region18: #{_gine_pallas.1} parent=11 // pred_check_branch
        %431 = sbr.rel (%p429) target = $region20
      $region19: #{_gine_pallas.1} parent=11 // pred_region
        _
      $region20: #{_gine_pallas.1} parent=11 // pred_fallthru
        _
      // Predicated region
      $region21: #{_gine_pallas.1} parent=11 // pred_check
        %p432 = pneg %p259
      $region22: #{_gine_pallas.1} parent=11 // pred_check_branch
        %434 = sbr.rel (%p432) target = $region24
      $region23: #{_gine_pallas.1} parent=11 // pred_region
        _
      $region24: #{_gine_pallas.1} parent=11 // pred_fallthru
        _
      // Predicated region
      $region25: #{_gine_pallas.1} parent=11 // pred_check
        %p435 = pneg %p280
      $region26: #{_gine_pallas.1} parent=11 // pred_check_branch
        %437 = sbr.rel (%p435) target = $region28
      $region27: #{_gine_pallas.1} parent=11 // pred_region
        _
      $region28: #{_gine_pallas.1} parent=11 // pred_fallthru
        _
      // Predicated region
      $region29: #{_gine_pallas.1} parent=11 // pred_check
        %p438 = pneg %p301
      $region30: #{_gine_pallas.1} parent=11 // pred_check_branch
        %440 = sbr.rel (%p438) target = $region32
      $region31: #{_gine_pallas.1} parent=11 // pred_region
        _
      $region32: #{_gine_pallas.1} parent=11 // pred_fallthru
        _
      // Predicated region
      $region33: #{_gine_pallas.1} parent=11 // pred_check
        %p441 = pneg %p322
      $region34: #{_gine_pallas.1} parent=11 // pred_check_branch
        %443 = sbr.rel (%p441) target = $region36
      $region35: #{_gine_pallas.1} parent=11 // pred_region
        _
      $region36: #{_gine_pallas.1} parent=11 // pred_fallthru
        _
      // Predicated region
      $region37: #{_gine_pallas.1} parent=11 // pred_check
        %p444 = pneg %p343
      $region38: #{_gine_pallas.1} parent=11 // pred_check_branch
        %446 = sbr.rel (%p444) target = $region40
      $region39: #{_gine_pallas.1} parent=11 // pred_region
        _
      $region40: #{_gine_pallas.1} parent=11 // pred_fallthru
        _
      // Predicated region
      $region41: #{_gine_pallas.1} parent=11 // pred_check
        %p447 = pneg %p364
      $region42: #{_gine_pallas.1} parent=11 // pred_check_branch
        %449 = sbr.rel (%p447) target = $region44
      $region43: #{_gine_pallas.1} parent=11 // pred_region
        _
      $region44: #{_gine_pallas.1} parent=11 // pred_fallthru
        _
      // Predicated region
      $region45: #{_gine_pallas.1} parent=11 // pred_check
        %p450 = pneg %p385
      $region46: #{_gine_pallas.1} parent=11 // pred_check_branch
        %452 = sbr.rel (%p450) target = $region48
      $region47: #{_gine_pallas.1} parent=11 // pred_region
        _
      $region48: #{_gine_pallas.1} parent=11 // pred_fallthru
        _
    $region12: #{_gine_pallas.1} parent=5 // pred_fallthru
      _
    %p453 = scmp.lt.s32.totalorder %s32, 2
    // Predicated region
    $region49: #{_gine_pallas.1} parent=5 // pred_check
      %p454 = pneg %p453
    $region50: #{_gine_pallas.1} parent=5 // pred_check_branch
      %456 = sbr.rel (%p454) target = $region52
    $region51: #{_gine_pallas.1} parent=5 // pred_region
      // Predicated region
      $region53: #{_gine_pallas.1} parent=51 // pred_check
        %p457 = pneg %p85
      $region54: #{_gine_pallas.1} parent=51 // pred_check_branch
        %459 = sbr.rel (%p457) target = $region56
      $region55: #{_gine_pallas.1} parent=51 // pred_region
        %s460 = smul.u32 8, %s39
        %p461 = scmp.lt.s32.totalorder %s460, 15
        %s462 = scalar_select %p461, %s460, 15
        %s463 = smul.addr %s462, 8
        %s464 = scalar_lea.vmem %s3, %s463
        %s465 = smul.u32 8, %s39
      $region56: #{_gine_pallas.1} parent=51 // pred_fallthru
        _
      // Predicated region
      $region57: #{_gine_pallas.1} parent=51 // pred_check
        %p466 = pneg %p127
      $region58: #{_gine_pallas.1} parent=51 // pred_check_branch
        %468 = sbr.rel (%p466) target = $region60
      $region59: #{_gine_pallas.1} parent=51 // pred_region
        %s469 = sld [smem:[#allocation5 + %s39]]
        %p470 = scmp.gt.s32.totalorder %s469, 0
        %s471 = ssub.s32 %s469, 1
        %p472 = scmp.lt.s32.totalorder %s40, %s471
        %s473 = scalar_select %p472, %s40, %s471
        %s474 = scalar_select %p470, %s473, 0
        %s475 = sld [smem:[#allocation4 + %s39]]
        %s476 = sadd.s32 %s475, %s474
        %s477 = smul.u32 64, %s476
        %p478 = scmp.lt.s32.totalorder %s477, 63
        %s479 = scalar_select %p478, %s477, 63
        %s480 = smul.addr %s479, 4
        %s481 = scalar_lea.vmem %s4, %s480
        %s482 = sld [smem:[#allocation5 + %s39]]
        %p483 = scmp.gt.s32.totalorder %s482, 0
        %s484 = ssub.s32 %s482, 1
        %p485 = scmp.lt.s32.totalorder %s40, %s484
        %s486 = scalar_select %p485, %s40, %s484
        %s487 = scalar_select %p483, %s486, 0
        %s488 = sld [smem:[#allocation4 + %s39]]
        %s489 = sadd.s32 %s488, %s487
        %s490 = smul.u32 64, %s489
      $region60: #{_gine_pallas.1} parent=51 // pred_fallthru
        _
      // Predicated region
      $region61: #{_gine_pallas.1} parent=51 // pred_check
        %p491 = pneg %p169
      $region62: #{_gine_pallas.1} parent=51 // pred_check_branch
        %493 = sbr.rel (%p491) target = $region64
      $region63: #{_gine_pallas.1} parent=51 // pred_region
        %s494 = sld [smem:[#allocation5 + %s39]]
        %p495 = scmp.gt.s32.totalorder %s494, 0
        %s496 = ssub.s32 %s494, 1
        %p497 = scmp.lt.s32.totalorder %s40, %s496
        %s498 = scalar_select %p497, %s40, %s496
        %s499 = scalar_select %p495, %s498, 0
        %s500 = sld [smem:[#allocation4 + %s39]]
        %s501 = sadd.s32 %s500, %s499
        %s502 = smul.u32 64, %s501
        %p503 = scmp.lt.s32.totalorder %s502, 63
        %s504 = scalar_select %p503, %s502, 63
        %s505 = smul.addr %s504, 4
        %s506 = scalar_lea.vmem %s5, %s505
        %s507 = sld [smem:[#allocation5 + %s39]]
        %p508 = scmp.gt.s32.totalorder %s507, 0
        %s509 = ssub.s32 %s507, 1
        %p510 = scmp.lt.s32.totalorder %s40, %s509
        %s511 = scalar_select %p510, %s40, %s509
        %s512 = scalar_select %p508, %s511, 0
        %s513 = sld [smem:[#allocation4 + %s39]]
        %s514 = sadd.s32 %s513, %s512
        %s515 = smul.u32 64, %s514
      $region64: #{_gine_pallas.1} parent=51 // pred_fallthru
        _
      // Predicated region
      $region65: #{_gine_pallas.1} parent=51 // pred_check
        %p516 = pneg %p211
      $region66: #{_gine_pallas.1} parent=51 // pred_check_branch
        %518 = sbr.rel (%p516) target = $region68
      $region67: #{_gine_pallas.1} parent=51 // pred_region
        %s519 = sld [smem:[#allocation5 + %s39]]
        %p520 = scmp.gt.s32.totalorder %s519, 0
        %s521 = ssub.s32 %s519, 1
        %p522 = scmp.lt.s32.totalorder %s40, %s521
        %s523 = scalar_select %p522, %s40, %s521
        %s524 = scalar_select %p520, %s523, 0
        %s525 = sld [smem:[#allocation4 + %s39]]
        %s526 = sadd.s32 %s525, %s524
        %s527 = smul.u32 4, %s526
        %p528 = scmp.lt.s32.totalorder %s527, 3
        %s529 = scalar_select %p528, %s527, 3
        %s530 = scalar_lea.vmem %s6, %s529
        %s531 = sld [smem:[#allocation5 + %s39]]
        %p532 = scmp.gt.s32.totalorder %s531, 0
        %s533 = ssub.s32 %s531, 1
        %p534 = scmp.lt.s32.totalorder %s40, %s533
        %s535 = scalar_select %p534, %s40, %s533
        %s536 = scalar_select %p532, %s535, 0
        %s537 = sld [smem:[#allocation4 + %s39]]
        %s538 = sadd.s32 %s537, %s536
        %s539 = smul.u32 4, %s538
      $region68: #{_gine_pallas.1} parent=51 // pred_fallthru
        _
    $region52: #{_gine_pallas.1} parent=5 // pred_fallthru
      _
    %p540 = scmp.le.s32.totalorder 1, %s32
    %p541 = scmp.lt.s32.totalorder %s32, 3
    %p542 = pnand %p540, %p541
    %p543 = pneg %p542
    // Predicated region
    $region69: #{_gine_pallas.1} parent=5 // pred_check
      _
    $region70: #{_gine_pallas.1} parent=5 // pred_check_branch
      %545 = sbr.rel (%p542) target = $region72
    $region71: #{_gine_pallas.1} parent=5 // pred_region
      %s546 = ssub.s32 %s32, 1
      %p547 = pneg %p65
      %p548 = pneg %p62
      %s549 = smul.u32 8, %s41
      %p550 = scmp.lt.s32.totalorder %s549, 15
      %s551 = scalar_select %p550, %s549, 15
      %s552 = smul.addr %s551, 8
      %s553 = scalar_lea.vmem %s3, %s552
      %p554 = pneg %p91
      %p555 = pneg %p88
      %s556 = sld [smem:[#allocation5 + %s41]]
      %p557 = scmp.gt.s32.totalorder %s556, 0
      %s558 = ssub.s32 %s556, 1
      %p559 = scmp.lt.s32.totalorder %s42, %s558
      %s560 = scalar_select %p559, %s42, %s558
      %s561 = scalar_select %p557, %s560, 0
      %s562 = sld [smem:[#allocation4 + %s41]]
      %s563 = sadd.s32 %s562, %s561
      %s564 = smul.u32 64, %s563
      %p565 = scmp.lt.s32.totalorder %s564, 63
      %s566 = scalar_select %p565, %s564, 63
      %s567 = smul.addr %s566, 4
      %s568 = scalar_lea.vmem %s4, %s567
      %p569 = pneg %p133
      %p570 = pneg %p130
      %s571 = sld [smem:[#allocation5 + %s41]]
      %p572 = scmp.gt.s32.totalorder %s571, 0
      %s573 = ssub.s32 %s571, 1
      %p574 = scmp.lt.s32.totalorder %s42, %s573
      %s575 = scalar_select %p574, %s42, %s573
      %s576 = scalar_select %p572, %s575, 0
      %s577 = sld [smem:[#allocation4 + %s41]]
      %s578 = sadd.s32 %s577, %s576
      %s579 = smul.u32 64, %s578
      %p580 = scmp.lt.s32.totalorder %s579, 63
      %s581 = scalar_select %p580, %s579, 63
      %s582 = smul.addr %s581, 4
      %s583 = scalar_lea.vmem %s5, %s582
      %p584 = pneg %p175
      %p585 = pneg %p172
      %s586 = sld [smem:[#allocation5 + %s41]]
      %p587 = scmp.gt.s32.totalorder %s586, 0
      %s588 = ssub.s32 %s586, 1
      %p589 = scmp.lt.s32.totalorder %s42, %s588
      %s590 = scalar_select %p589, %s42, %s588
      %s591 = scalar_select %p587, %s590, 0
      %s592 = sld [smem:[#allocation4 + %s41]]
      %s593 = sadd.s32 %s592, %s591
      %s594 = smul.u32 4, %s593
      %p595 = scmp.lt.s32.totalorder %s594, 3
      %s596 = scalar_select %p595, %s594, 3
      %s597 = scalar_lea.vmem %s6, %s596
      %p598 = pneg %p217
      %p599 = pneg %p214
      %p600 = pneg %p238
      %p601 = pneg %p235
      %p602 = pneg %p259
      %p603 = pneg %p256
      %p604 = pneg %p280
      %p605 = pneg %p277
      %p606 = pneg %p301
      %p607 = pneg %p298
      %p608 = pneg %p322
      %p609 = pneg %p319
      %p610 = pneg %p343
      %p611 = pneg %p340
      %p612 = pneg %p364
      %p613 = pneg %p361
      %p614 = pneg %p385
      %p615 = pneg %p382
      %p616 = pneg %p411
      %p617 = pneg %p408
      %s618 = smul.u32 8, %s41
      %p619 = scmp.lt.s32.totalorder %s618, 15
      %s620 = scalar_select %p619, %s618, 15
      %s621 = smul.addr %s620, 8
      %s622 = scalar_lea.vmem %s15, %s621
      %s623 = smul.u32 8, %s41
      %p624 = scmp.lt.s32.totalorder %s623, 15
      %s625 = scalar_select %p624, %s623, 15
      %s626 = smul.addr %s625, 8
      %s627 = scalar_lea.vmem %s3, %s626
      %s628 = smul.u32 8, %s41
      %s629 = sld [smem:[#allocation5 + %s41]]
      %p630 = scmp.gt.s32.totalorder %s629, 0
      %s631 = ssub.s32 %s629, 1
      %p632 = scmp.lt.s32.totalorder %s42, %s631
      %s633 = scalar_select %p632, %s42, %s631
      %s634 = scalar_select %p630, %s633, 0
      %s635 = sld [smem:[#allocation4 + %s41]]
      %s636 = sadd.s32 %s635, %s634
      %s637 = smul.u32 64, %s636
      %p638 = scmp.lt.s32.totalorder %s637, 63
      %s639 = scalar_select %p638, %s637, 63
      %s640 = smul.addr %s639, 4
      %s641 = scalar_lea.vmem %s4, %s640
      %s642 = sld [smem:[#allocation5 + %s41]]
      %p643 = scmp.gt.s32.totalorder %s642, 0
      %s644 = ssub.s32 %s642, 1
      %p645 = scmp.lt.s32.totalorder %s42, %s644
      %s646 = scalar_select %p645, %s42, %s644
      %s647 = scalar_select %p643, %s646, 0
      %s648 = sld [smem:[#allocation4 + %s41]]
      %s649 = sadd.s32 %s648, %s647
      %s650 = smul.u32 64, %s649
      %s651 = sld [smem:[#allocation5 + %s41]]
      %p652 = scmp.gt.s32.totalorder %s651, 0
      %s653 = ssub.s32 %s651, 1
      %p654 = scmp.lt.s32.totalorder %s42, %s653
      %s655 = scalar_select %p654, %s42, %s653
      %s656 = scalar_select %p652, %s655, 0
      %s657 = sld [smem:[#allocation4 + %s41]]
      %s658 = sadd.s32 %s657, %s656
      %s659 = smul.u32 64, %s658
      %p660 = scmp.lt.s32.totalorder %s659, 63
      %s661 = scalar_select %p660, %s659, 63
      %s662 = smul.addr %s661, 4
      %s663 = scalar_lea.vmem %s5, %s662
      %s664 = sld [smem:[#allocation5 + %s41]]
      %p665 = scmp.gt.s32.totalorder %s664, 0
      %s666 = ssub.s32 %s664, 1
      %p667 = scmp.lt.s32.totalorder %s42, %s666
      %s668 = scalar_select %p667, %s42, %s666
      %s669 = scalar_select %p665, %s668, 0
      %s670 = sld [smem:[#allocation4 + %s41]]
      %s671 = sadd.s32 %s670, %s669
      %s672 = smul.u32 64, %s671
      %s673 = sld [smem:[#allocation5 + %s41]]
      %p674 = scmp.gt.s32.totalorder %s673, 0
      %s675 = ssub.s32 %s673, 1
      %p676 = scmp.lt.s32.totalorder %s42, %s675
      %s677 = scalar_select %p676, %s42, %s675
      %s678 = scalar_select %p674, %s677, 0
      %s679 = sld [smem:[#allocation4 + %s41]]
      %s680 = sadd.s32 %s679, %s678
      %s681 = smul.u32 4, %s680
      %p682 = scmp.lt.s32.totalorder %s681, 3
      %s683 = scalar_select %p682, %s681, 3
      %s684 = scalar_lea.vmem %s6, %s683
      %s685 = sld [smem:[#allocation5 + %s41]]
      %p686 = scmp.gt.s32.totalorder %s685, 0
      %s687 = ssub.s32 %s685, 1
      %p688 = scmp.lt.s32.totalorder %s42, %s687
      %s689 = scalar_select %p688, %s42, %s687
      %s690 = scalar_select %p686, %s689, 0
      %s691 = sld [smem:[#allocation4 + %s41]]
      %s692 = sadd.s32 %s691, %s690
      %s693 = smul.u32 4, %s692
      %s694 = smul.u32 8, %s41
      %p695 = scmp.lt.s32.totalorder %s694, 15
      %s696 = scalar_select %p695, %s694, 15
      %s697 = smul.addr %s696, 8
      %s698 = scalar_lea.vmem %s15, %s697
      %s699 = smul.u32 8, %s41
      %p701 = scmp.eq.s32.totalorder %s42, 0
      // Predicated region
      $region73: #{_gine_pallas.1} parent=71 // pred_check
        %p702 = pneg %p701
      $region74: #{_gine_pallas.1} parent=71 // pred_check_branch
        %704 = sbr.rel (%p702) target = $region76
      $region75: #{_gine_pallas.1} parent=71 // pred_region
        %705 = vst [vmem:[#allocation2] sm:$0xff] 0.0
        %706 = vst [vmem:[#allocation2 + $0x8] sm:$0xff] 0.0
        %707 = vst [vmem:[#allocation2 + $0x10] sm:$0xff] 0.0
        %708 = vst [vmem:[#allocation2 + $0x18] sm:$0xff] 0.0
        %709 = vst [vmem:[#allocation2 + $0x20] sm:$0xff] 0.0
        %710 = vst [vmem:[#allocation2 + $0x28] sm:$0xff] 0.0
        %711 = vst [vmem:[#allocation2 + $0x30] sm:$0xff] 0.0
        %712 = vst [vmem:[#allocation2 + $0x38] sm:$0xff] 0.0
      $region76: #{_gine_pallas.1} parent=71 // pred_fallthru
        _
      %s713 = sld [smem:[#allocation5 + %s41]]
      %p714 = scmp.lt.s32.totalorder %s42, %s713
      // Predicated region
      $region77: #{_gine_pallas.1} parent=71 // pred_check
        %p715 = pneg %p714
      $region78: #{_gine_pallas.1} parent=71 // pred_check_branch
        %717 = sbr.rel (%p715) target = $region80
      $region79: #{_gine_pallas.1} parent=71 // pred_region
        %v718 = vld [vmem:[%s663] sm:$0xf]
        %v719 = vld [vmem:[%s663 + $0x4] sm:$0xf]
        %v720 = vld [vmem:[%s663 + $0x8] sm:$0xf]
        %v721 = vld [vmem:[%s663 + $0xc] sm:$0xf]
        %v722 = vld [vmem:[%s663 + $0x10] sm:$0xf]
        %v723 = vld [vmem:[%s663 + $0x14] sm:$0xf]
        %v724 = vld [vmem:[%s663 + $0x18] sm:$0xf]
        %v725 = vld [vmem:[%s663 + $0x1c] sm:$0xf]
        %v726 = vld [vmem:[%s663 + $0x20] sm:$0xf]
        %v727 = vld [vmem:[%s663 + $0x24] sm:$0xf]
        %v728 = vld [vmem:[%s663 + $0x28] sm:$0xf]
        %v729 = vld [vmem:[%s663 + $0x2c] sm:$0xf]
        %v730 = vld [vmem:[%s663 + $0x30] sm:$0xf]
        %v731 = vld [vmem:[%s663 + $0x34] sm:$0xf]
        %v732 = vld [vmem:[%s663 + $0x38] sm:$0xf]
        %v733 = vld [vmem:[%s663 + $0x3c] sm:$0xf]
        %v734 = vld [vmem:[%s663 + $0x40] sm:$0xf]
        %v735 = vld [vmem:[%s663 + $0x44] sm:$0xf]
        %v736 = vld [vmem:[%s663 + $0x48] sm:$0xf]
        %v737 = vld [vmem:[%s663 + $0x4c] sm:$0xf]
        %v738 = vld [vmem:[%s663 + $0x50] sm:$0xf]
        %v739 = vld [vmem:[%s663 + $0x54] sm:$0xf]
        %v740 = vld [vmem:[%s663 + $0x58] sm:$0xf]
        %v741 = vld [vmem:[%s663 + $0x5c] sm:$0xf]
        %v742 = vld [vmem:[%s663 + $0x60] sm:$0xf]
        %v743 = vld [vmem:[%s663 + $0x64] sm:$0xf]
        %v744 = vld [vmem:[%s663 + $0x68] sm:$0xf]
        %v745 = vld [vmem:[%s663 + $0x6c] sm:$0xf]
        %v746 = vld [vmem:[%s663 + $0x70] sm:$0xf]
        %v747 = vld [vmem:[%s663 + $0x74] sm:$0xf]
        %v748 = vld [vmem:[%s663 + $0x78] sm:$0xf]
        %v749 = vld [vmem:[%s663 + $0x7c] sm:$0xf]
        %v750 = vld [vmem:[%s663 + $0x80] sm:$0xf]
        %v751 = vld [vmem:[%s663 + $0x84] sm:$0xf]
        %v752 = vld [vmem:[%s663 + $0x88] sm:$0xf]
        %v753 = vld [vmem:[%s663 + $0x8c] sm:$0xf]
        %v754 = vld [vmem:[%s663 + $0x90] sm:$0xf]
        %v755 = vld [vmem:[%s663 + $0x94] sm:$0xf]
        %v756 = vld [vmem:[%s663 + $0x98] sm:$0xf]
        %v757 = vld [vmem:[%s663 + $0x9c] sm:$0xf]
        %v758 = vld [vmem:[%s663 + $0xa0] sm:$0xf]
        %v759 = vld [vmem:[%s663 + $0xa4] sm:$0xf]
        %v760 = vld [vmem:[%s663 + $0xa8] sm:$0xf]
        %v761 = vld [vmem:[%s663 + $0xac] sm:$0xf]
        %v762 = vld [vmem:[%s663 + $0xb0] sm:$0xf]
        %v763 = vld [vmem:[%s663 + $0xb4] sm:$0xf]
        %v764 = vld [vmem:[%s663 + $0xb8] sm:$0xf]
        %v765 = vld [vmem:[%s663 + $0xbc] sm:$0xf]
        %v766 = vld [vmem:[%s663 + $0xc0] sm:$0xf]
        %v767 = vld [vmem:[%s663 + $0xc4] sm:$0xf]
        %v768 = vld [vmem:[%s663 + $0xc8] sm:$0xf]
        %v769 = vld [vmem:[%s663 + $0xcc] sm:$0xf]
        %v770 = vld [vmem:[%s663 + $0xd0] sm:$0xf]
        %v771 = vld [vmem:[%s663 + $0xd4] sm:$0xf]
        %v772 = vld [vmem:[%s663 + $0xd8] sm:$0xf]
        %v773 = vld [vmem:[%s663 + $0xdc] sm:$0xf]
        %v774 = vld [vmem:[%s663 + $0xe0] sm:$0xf]
        %v775 = vld [vmem:[%s663 + $0xe4] sm:$0xf]
        %v776 = vld [vmem:[%s663 + $0xe8] sm:$0xf]
        %v777 = vld [vmem:[%s663 + $0xec] sm:$0xf]
        %v778 = vld [vmem:[%s663 + $0xf0] sm:$0xf]
        %v779 = vld [vmem:[%s663 + $0xf4] sm:$0xf]
        %v780 = vld [vmem:[%s663 + $0xf8] sm:$0xf]
        %v781 = vld [vmem:[%s663 + $0xfc] sm:$0xf]
        %v782 = vld [vmem:[%s7] sm:$0xf]
        %v783 = vld [vmem:[%s7 + $0x4] sm:$0xf]
        %v784 = vld [vmem:[%s8] sm:$0x1]
        %v786 = vlaneseq
        %v787 = vshrl.u32 %v786, 7
        %v788 = vsub.s32 0, %v787
        %v789 = vrot.slane %v784, %v788
        %v855 = vunpack.c.l.b16 %v718
        %v856 = vunpack.c.l.b16 %v719
        %v857 = vunpack.c.l.b16 %v720
        %v858 = vunpack.c.l.b16 %v721
        %v859 = vunpack.c.l.b16 %v722
        %v860 = vunpack.c.l.b16 %v723
        %v861 = vunpack.c.l.b16 %v724
        %v862 = vunpack.c.l.b16 %v725
        %v863 = vunpack.c.l.b16 %v726
        %v864 = vunpack.c.l.b16 %v727
        %v865 = vunpack.c.l.b16 %v728
        %v866 = vunpack.c.l.b16 %v729
        %v867 = vunpack.c.l.b16 %v730
        %v868 = vunpack.c.l.b16 %v731
        %v869 = vunpack.c.l.b16 %v732
        %v870 = vunpack.c.l.b16 %v733
        %v871 = vunpack.c.l.b16 %v734
        %v872 = vunpack.c.l.b16 %v735
        %v873 = vunpack.c.l.b16 %v736
        %v874 = vunpack.c.l.b16 %v737
        %v875 = vunpack.c.l.b16 %v738
        %v876 = vunpack.c.l.b16 %v739
        %v877 = vunpack.c.l.b16 %v740
        %v878 = vunpack.c.l.b16 %v741
        %v879 = vunpack.c.l.b16 %v742
        %v880 = vunpack.c.l.b16 %v743
        %v881 = vunpack.c.l.b16 %v744
        %v882 = vunpack.c.l.b16 %v745
        %v883 = vunpack.c.l.b16 %v746
        %v884 = vunpack.c.l.b16 %v747
        %v885 = vunpack.c.l.b16 %v748
        %v886 = vunpack.c.l.b16 %v749
        %v887 = vunpack.c.l.b16 %v750
        %v888 = vunpack.c.l.b16 %v751
        %v889 = vunpack.c.l.b16 %v752
        %v890 = vunpack.c.l.b16 %v753
        %v891 = vunpack.c.l.b16 %v754
        %v892 = vunpack.c.l.b16 %v755
        %v893 = vunpack.c.l.b16 %v756
        %v894 = vunpack.c.l.b16 %v757
        %v895 = vunpack.c.l.b16 %v758
        %v896 = vunpack.c.l.b16 %v759
        %v897 = vunpack.c.l.b16 %v760
        %v898 = vunpack.c.l.b16 %v761
        %v899 = vunpack.c.l.b16 %v762
        %v900 = vunpack.c.l.b16 %v763
        %v901 = vunpack.c.l.b16 %v764
        %v902 = vunpack.c.l.b16 %v765
        %v903 = vunpack.c.l.b16 %v766
        %v904 = vunpack.c.l.b16 %v767
        %v905 = vunpack.c.l.b16 %v768
        %v906 = vunpack.c.l.b16 %v769
        %v907 = vunpack.c.l.b16 %v770
        %v908 = vunpack.c.l.b16 %v771
        %v909 = vunpack.c.l.b16 %v772
        %v910 = vunpack.c.l.b16 %v773
        %v911 = vunpack.c.l.b16 %v774
        %v912 = vunpack.c.l.b16 %v775
        %v913 = vunpack.c.l.b16 %v776
        %v914 = vunpack.c.l.b16 %v777
        %v915 = vunpack.c.l.b16 %v778
        %v916 = vunpack.c.l.b16 %v779
        %v917 = vunpack.c.l.b16 %v780
        %v918 = vunpack.c.l.b16 %v781
        %v919 = vpack.c.b16 %v856, %v855
        %v920 = vpack.c.b16 %v858, %v857
        %v921 = vpack.c.b16 %v860, %v859
        %v922 = vpack.c.b16 %v862, %v861
        %v923 = vpack.c.b16 %v864, %v863
        %v924 = vpack.c.b16 %v866, %v865
        %v925 = vpack.c.b16 %v868, %v867
        %v926 = vpack.c.b16 %v870, %v869
        %v927 = vpack.c.b16 %v872, %v871
        %v928 = vpack.c.b16 %v874, %v873
        %v929 = vpack.c.b16 %v876, %v875
        %v930 = vpack.c.b16 %v878, %v877
        %v931 = vpack.c.b16 %v880, %v879
        %v932 = vpack.c.b16 %v882, %v881
        %v933 = vpack.c.b16 %v884, %v883
        %v934 = vpack.c.b16 %v886, %v885
        %v935 = vpack.c.b16 %v888, %v887
        %v936 = vpack.c.b16 %v890, %v889
        %v937 = vpack.c.b16 %v892, %v891
        %v938 = vpack.c.b16 %v894, %v893
        %v939 = vpack.c.b16 %v896, %v895
        %v940 = vpack.c.b16 %v898, %v897
        %v941 = vpack.c.b16 %v900, %v899
        %v942 = vpack.c.b16 %v902, %v901
        %v943 = vpack.c.b16 %v904, %v903
        %v944 = vpack.c.b16 %v906, %v905
        %v945 = vpack.c.b16 %v908, %v907
        %v946 = vpack.c.b16 %v910, %v909
        %v947 = vpack.c.b16 %v912, %v911
        %v948 = vpack.c.b16 %v914, %v913
        %v949 = vpack.c.b16 %v916, %v915
        %v950 = vpack.c.b16 %v918, %v917
        %v953 = vunpack.c.l.b16 %v782
        %v954 = vunpack.c.l.b16 %v783
        %v955 = vpack.c.b16 %v954, %v953
        %vm957 = vcmask 130048
        %v959 = vsel %vm957, %v919, 0
        %v962 = vsel %vm957, %v920, 0
        %v965 = vsel %vm957, %v921, 0
        %v968 = vsel %vm957, %v922, 0
        %v971 = vsel %vm957, %v923, 0
        %v974 = vsel %vm957, %v924, 0
        %v977 = vsel %vm957, %v925, 0
        %v980 = vsel %vm957, %v926, 0
        %v983 = vsel %vm957, %v927, 0
        %v986 = vsel %vm957, %v928, 0
        %v989 = vsel %vm957, %v929, 0
        %v992 = vsel %vm957, %v930, 0
        %v995 = vsel %vm957, %v931, 0
        %v998 = vsel %vm957, %v932, 0
        %v1001 = vsel %vm957, %v933, 0
        %v1004 = vsel %vm957, %v934, 0
        %v1007 = vsel %vm957, %v935, 0
        %v1010 = vsel %vm957, %v936, 0
        %v1013 = vsel %vm957, %v937, 0
        %v1016 = vsel %vm957, %v938, 0
        %v1019 = vsel %vm957, %v939, 0
        %v1022 = vsel %vm957, %v940, 0
        %v1025 = vsel %vm957, %v941, 0
        %v1028 = vsel %vm957, %v942, 0
        %v1031 = vsel %vm957, %v943, 0
        %v1034 = vsel %vm957, %v944, 0
        %v1037 = vsel %vm957, %v945, 0
        %v1040 = vsel %vm957, %v946, 0
        %v1043 = vsel %vm957, %v947, 0
        %v1046 = vsel %vm957, %v948, 0
        %v1049 = vsel %vm957, %v949, 0
        %v1052 = vsel %vm957, %v950, 0
        %1054 = vmatprep.subr.bf16.mxu0 0
        %1055 = vmatpush1.bf16.msra.mxu0 0
        %1056 = vmatprep.subr.bf16.mxu0 0
        %1057 = vmatpush1.bf16.msra.mxu0 0
        %1058 = vmatprep.subr.bf16.mxu0 0
        %1059 = vmatpush1.bf16.msra.mxu0 0
        %1060 = vmatprep.subr.bf16.mxu0 0
        %1061 = vmatpush1.bf16.msra.mxu0 0
        %1062 = vmatprep.subr.bf16.mxu0 0
        %1063 = vmatpush1.bf16.msra.mxu0 0
        %1064 = vmatprep.subr.bf16.mxu0 0
        %1065 = vmatpush1.bf16.msra.mxu0 0
        %1066 = vmatprep.subr.bf16.mxu0 0
        %1067 = vmatpush1.bf16.msra.mxu0 0
        %1068 = vmatprep.subr.bf16.mxu0 0
        %1069 = vmatpush1.bf16.msra.mxu0 %v955
        %1070 = vmatprep.subr.bf16.mxu0 0
        %1071 = vmatpush2.bf16.msra.mxu0 0
        %1072 = vmatprep.subr.bf16.mxu0 0
        %1073 = vmatpush2.bf16.msra.mxu0 0
        %1074 = vmatprep.subr.bf16.mxu0 0
        %1075 = vmatpush2.bf16.msra.mxu0 0
        %1076 = vmatprep.subr.bf16.mxu0 0
        %1077 = vmatpush2.bf16.msra.mxu0 0
        %1078 = vmatprep.subr.bf16.mxu0 0
        %1079 = vmatpush2.bf16.msra.mxu0 0
        %1080 = vmatprep.subr.bf16.mxu0 0
        %1081 = vmatpush2.bf16.msra.mxu0 0
        %1082 = vmatprep.subr.bf16.mxu0 0
        %1083 = vmatpush2.bf16.msra.mxu0 0
        %1084 = vmatprep.subr.bf16.mxu0 0
        %1085 = vmatpush2.bf16.msra.mxu0 0
        %1086 = vmatprep.mubr.bf16.mxu0 0
        %1087 = vmatmul.mubr.bf16.gmra.mxu0 %v959
        %v1088 = vpop.f32.mrf.mxu0
        %v1089 = vadd.f32 %v789, %v1088
        %v1090 = vpop.f32.mrf.mxu0
        %v1091 = vpop.f32.mrf.mxu0
        %v1092 = vadd.f32 %v789, %v1091
        %v1093 = vpop.f32.mrf.mxu0
        %1094 = vmatprep.mubr.bf16.mxu0 0
        %1095 = vmatmul.mubr.bf16.gmra.mxu0 %v962
        %v1096 = vpop.f32.mrf.mxu0
        %v1097 = vadd.f32 %v789, %v1096
        %v1098 = vpop.f32.mrf.mxu0
        %v1099 = vpop.f32.mrf.mxu0
        %v1100 = vadd.f32 %v789, %v1099
        %v1101 = vpop.f32.mrf.mxu0
        %1102 = vmatprep.mubr.bf16.mxu0 0
        %1103 = vmatmul.mubr.bf16.gmra.mxu0 %v965
        %v1104 = vpop.f32.mrf.mxu0
        %v1105 = vadd.f32 %v789, %v1104
        %v1106 = vpop.f32.mrf.mxu0
        %v1107 = vpop.f32.mrf.mxu0
        %v1108 = vadd.f32 %v789, %v1107
        %v1109 = vpop.f32.mrf.mxu0
        %1110 = vmatprep.mubr.bf16.mxu0 0
        %1111 = vmatmul.mubr.bf16.gmra.mxu0 %v968
        %v1112 = vpop.f32.mrf.mxu0
        %v1113 = vadd.f32 %v789, %v1112
        %v1114 = vpop.f32.mrf.mxu0
        %v1115 = vpop.f32.mrf.mxu0
        %v1116 = vadd.f32 %v789, %v1115
        %v1117 = vpop.f32.mrf.mxu0
        %1118 = vmatprep.mubr.bf16.mxu0 0
        %1119 = vmatmul.mubr.bf16.gmra.mxu0 %v971
        %v1120 = vpop.f32.mrf.mxu0
        %v1121 = vadd.f32 %v789, %v1120
        %v1122 = vpop.f32.mrf.mxu0
        %v1123 = vpop.f32.mrf.mxu0
        %v1124 = vadd.f32 %v789, %v1123
        %v1125 = vpop.f32.mrf.mxu0
        %1126 = vmatprep.mubr.bf16.mxu0 0
        %1127 = vmatmul.mubr.bf16.gmra.mxu0 %v974
        %v1128 = vpop.f32.mrf.mxu0
        %v1129 = vadd.f32 %v789, %v1128
        %v1130 = vpop.f32.mrf.mxu0
        %v1131 = vpop.f32.mrf.mxu0
        %v1132 = vadd.f32 %v789, %v1131
        %v1133 = vpop.f32.mrf.mxu0
        %1134 = vmatprep.mubr.bf16.mxu0 0
        %1135 = vmatmul.mubr.bf16.gmra.mxu0 %v977
        %v1136 = vpop.f32.mrf.mxu0
        %v1137 = vadd.f32 %v789, %v1136
        %v1138 = vpop.f32.mrf.mxu0
        %v1139 = vpop.f32.mrf.mxu0
        %v1140 = vadd.f32 %v789, %v1139
        %v1141 = vpop.f32.mrf.mxu0
        %1142 = vmatprep.mubr.bf16.mxu0 0
        %1143 = vmatmul.mubr.bf16.gmra.mxu0 %v980
        %v1144 = vpop.f32.mrf.mxu0
        %v1145 = vadd.f32 %v789, %v1144
        %v1146 = vpop.f32.mrf.mxu0
        %v1147 = vpop.f32.mrf.mxu0
        %v1148 = vadd.f32 %v789, %v1147
        %v1149 = vpop.f32.mrf.mxu0
        %1150 = vmatprep.mubr.bf16.mxu0 0
        %1151 = vmatmul.mubr.bf16.gmra.mxu0 %v983
        %v1152 = vpop.f32.mrf.mxu0
        %v1153 = vadd.f32 %v789, %v1152
        %v1154 = vpop.f32.mrf.mxu0
        %v1155 = vpop.f32.mrf.mxu0
        %v1156 = vadd.f32 %v789, %v1155
        %v1157 = vpop.f32.mrf.mxu0
        %1158 = vmatprep.mubr.bf16.mxu0 0
        %1159 = vmatmul.mubr.bf16.gmra.mxu0 %v986
        %v1160 = vpop.f32.mrf.mxu0
        %v1161 = vadd.f32 %v789, %v1160
        %v1162 = vpop.f32.mrf.mxu0
        %v1163 = vpop.f32.mrf.mxu0
        %v1164 = vadd.f32 %v789, %v1163
        %v1165 = vpop.f32.mrf.mxu0
        %1166 = vmatprep.mubr.bf16.mxu0 0
        %1167 = vmatmul.mubr.bf16.gmra.mxu0 %v989
        %v1168 = vpop.f32.mrf.mxu0
        %v1169 = vadd.f32 %v789, %v1168
        %v1170 = vpop.f32.mrf.mxu0
        %v1171 = vpop.f32.mrf.mxu0
        %v1172 = vadd.f32 %v789, %v1171
        %v1173 = vpop.f32.mrf.mxu0
        %1174 = vmatprep.mubr.bf16.mxu0 0
        %1175 = vmatmul.mubr.bf16.gmra.mxu0 %v992
        %v1176 = vpop.f32.mrf.mxu0
        %v1177 = vadd.f32 %v789, %v1176
        %v1178 = vpop.f32.mrf.mxu0
        %v1179 = vpop.f32.mrf.mxu0
        %v1180 = vadd.f32 %v789, %v1179
        %v1181 = vpop.f32.mrf.mxu0
        %1182 = vmatprep.mubr.bf16.mxu0 0
        %1183 = vmatmul.mubr.bf16.gmra.mxu0 %v995
        %v1184 = vpop.f32.mrf.mxu0
        %v1185 = vadd.f32 %v789, %v1184
        %v1186 = vpop.f32.mrf.mxu0
        %v1187 = vpop.f32.mrf.mxu0
        %v1188 = vadd.f32 %v789, %v1187
        %v1189 = vpop.f32.mrf.mxu0
        %1190 = vmatprep.mubr.bf16.mxu0 0
        %1191 = vmatmul.mubr.bf16.gmra.mxu0 %v998
        %v1192 = vpop.f32.mrf.mxu0
        %v1193 = vadd.f32 %v789, %v1192
        %v1194 = vpop.f32.mrf.mxu0
        %v1195 = vpop.f32.mrf.mxu0
        %v1196 = vadd.f32 %v789, %v1195
        %v1197 = vpop.f32.mrf.mxu0
        %1198 = vmatprep.mubr.bf16.mxu0 0
        %1199 = vmatmul.mubr.bf16.gmra.mxu0 %v1001
        %v1200 = vpop.f32.mrf.mxu0
        %v1201 = vadd.f32 %v789, %v1200
        %v1202 = vpop.f32.mrf.mxu0
        %v1203 = vpop.f32.mrf.mxu0
        %v1204 = vadd.f32 %v789, %v1203
        %v1205 = vpop.f32.mrf.mxu0
        %1206 = vmatprep.mubr.bf16.mxu0 0
        %1207 = vmatmul.mubr.bf16.gmra.mxu0 %v1004
        %v1208 = vpop.f32.mrf.mxu0
        %v1209 = vadd.f32 %v789, %v1208
        %v1210 = vpop.f32.mrf.mxu0
        %v1211 = vpop.f32.mrf.mxu0
        %v1212 = vadd.f32 %v789, %v1211
        %v1213 = vpop.f32.mrf.mxu0
        %1214 = vmatprep.mubr.bf16.mxu0 0
        %1215 = vmatmul.mubr.bf16.gmra.mxu0 %v1007
        %v1216 = vpop.f32.mrf.mxu0
        %v1217 = vadd.f32 %v789, %v1216
        %v1218 = vpop.f32.mrf.mxu0
        %v1219 = vpop.f32.mrf.mxu0
        %v1220 = vadd.f32 %v789, %v1219
        %v1221 = vpop.f32.mrf.mxu0
        %1222 = vmatprep.mubr.bf16.mxu0 0
        %1223 = vmatmul.mubr.bf16.gmra.mxu0 %v1010
        %v1224 = vpop.f32.mrf.mxu0
        %v1225 = vadd.f32 %v789, %v1224
        %v1226 = vpop.f32.mrf.mxu0
        %v1227 = vpop.f32.mrf.mxu0
        %v1228 = vadd.f32 %v789, %v1227
        %v1229 = vpop.f32.mrf.mxu0
        %1230 = vmatprep.mubr.bf16.mxu0 0
        %1231 = vmatmul.mubr.bf16.gmra.mxu0 %v1013
        %v1232 = vpop.f32.mrf.mxu0
        %v1233 = vadd.f32 %v789, %v1232
        %v1234 = vpop.f32.mrf.mxu0
        %v1235 = vpop.f32.mrf.mxu0
        %v1236 = vadd.f32 %v789, %v1235
        %v1237 = vpop.f32.mrf.mxu0
        %1238 = vmatprep.mubr.bf16.mxu0 0
        %1239 = vmatmul.mubr.bf16.gmra.mxu0 %v1016
        %v1240 = vpop.f32.mrf.mxu0
        %v1241 = vadd.f32 %v789, %v1240
        %v1242 = vpop.f32.mrf.mxu0
        %v1243 = vpop.f32.mrf.mxu0
        %v1244 = vadd.f32 %v789, %v1243
        %v1245 = vpop.f32.mrf.mxu0
        %1246 = vmatprep.mubr.bf16.mxu0 0
        %1247 = vmatmul.mubr.bf16.gmra.mxu0 %v1019
        %v1248 = vpop.f32.mrf.mxu0
        %v1249 = vadd.f32 %v789, %v1248
        %v1250 = vpop.f32.mrf.mxu0
        %v1251 = vpop.f32.mrf.mxu0
        %v1252 = vadd.f32 %v789, %v1251
        %v1253 = vpop.f32.mrf.mxu0
        %1254 = vmatprep.mubr.bf16.mxu0 0
        %1255 = vmatmul.mubr.bf16.gmra.mxu0 %v1022
        %v1256 = vpop.f32.mrf.mxu0
        %v1257 = vadd.f32 %v789, %v1256
        %v1258 = vpop.f32.mrf.mxu0
        %v1259 = vpop.f32.mrf.mxu0
        %v1260 = vadd.f32 %v789, %v1259
        %v1261 = vpop.f32.mrf.mxu0
        %1262 = vmatprep.mubr.bf16.mxu0 0
        %1263 = vmatmul.mubr.bf16.gmra.mxu0 %v1025
        %v1264 = vpop.f32.mrf.mxu0
        %v1265 = vadd.f32 %v789, %v1264
        %v1266 = vpop.f32.mrf.mxu0
        %v1267 = vpop.f32.mrf.mxu0
        %v1268 = vadd.f32 %v789, %v1267
        %v1269 = vpop.f32.mrf.mxu0
        %1270 = vmatprep.mubr.bf16.mxu0 0
        %1271 = vmatmul.mubr.bf16.gmra.mxu0 %v1028
        %v1272 = vpop.f32.mrf.mxu0
        %v1273 = vadd.f32 %v789, %v1272
        %v1274 = vpop.f32.mrf.mxu0
        %v1275 = vpop.f32.mrf.mxu0
        %v1276 = vadd.f32 %v789, %v1275
        %v1277 = vpop.f32.mrf.mxu0
        %1278 = vmatprep.mubr.bf16.mxu0 0
        %1279 = vmatmul.mubr.bf16.gmra.mxu0 %v1031
        %v1280 = vpop.f32.mrf.mxu0
        %v1281 = vadd.f32 %v789, %v1280
        %v1282 = vpop.f32.mrf.mxu0
        %v1283 = vpop.f32.mrf.mxu0
        %v1284 = vadd.f32 %v789, %v1283
        %v1285 = vpop.f32.mrf.mxu0
        %1286 = vmatprep.mubr.bf16.mxu0 0
        %1287 = vmatmul.mubr.bf16.gmra.mxu0 %v1034
        %v1288 = vpop.f32.mrf.mxu0
        %v1289 = vadd.f32 %v789, %v1288
        %v1290 = vpop.f32.mrf.mxu0
        %v1291 = vpop.f32.mrf.mxu0
        %v1292 = vadd.f32 %v789, %v1291
        %v1293 = vpop.f32.mrf.mxu0
        %1294 = vmatprep.mubr.bf16.mxu0 0
        %1295 = vmatmul.mubr.bf16.gmra.mxu0 %v1037
        %v1296 = vpop.f32.mrf.mxu0
        %v1297 = vadd.f32 %v789, %v1296
        %v1298 = vpop.f32.mrf.mxu0
        %v1299 = vpop.f32.mrf.mxu0
        %v1300 = vadd.f32 %v789, %v1299
        %v1301 = vpop.f32.mrf.mxu0
        %1302 = vmatprep.mubr.bf16.mxu0 0
        %1303 = vmatmul.mubr.bf16.gmra.mxu0 %v1040
        %v1304 = vpop.f32.mrf.mxu0
        %v1305 = vadd.f32 %v789, %v1304
        %v1306 = vpop.f32.mrf.mxu0
        %v1307 = vpop.f32.mrf.mxu0
        %v1308 = vadd.f32 %v789, %v1307
        %v1309 = vpop.f32.mrf.mxu0
        %1310 = vmatprep.mubr.bf16.mxu0 0
        %1311 = vmatmul.mubr.bf16.gmra.mxu0 %v1043
        %v1312 = vpop.f32.mrf.mxu0
        %v1313 = vadd.f32 %v789, %v1312
        %v1314 = vpop.f32.mrf.mxu0
        %v1315 = vpop.f32.mrf.mxu0
        %v1316 = vadd.f32 %v789, %v1315
        %v1317 = vpop.f32.mrf.mxu0
        %1318 = vmatprep.mubr.bf16.mxu0 0
        %1319 = vmatmul.mubr.bf16.gmra.mxu0 %v1046
        %v1320 = vpop.f32.mrf.mxu0
        %v1321 = vadd.f32 %v789, %v1320
        %v1322 = vpop.f32.mrf.mxu0
        %v1323 = vpop.f32.mrf.mxu0
        %v1324 = vadd.f32 %v789, %v1323
        %v1325 = vpop.f32.mrf.mxu0
        %1326 = vmatprep.mubr.bf16.mxu0 0
        %1327 = vmatmul.mubr.bf16.gmra.mxu0 %v1049
        %v1328 = vpop.f32.mrf.mxu0
        %v1329 = vadd.f32 %v789, %v1328
        %v1330 = vpop.f32.mrf.mxu0
        %v1331 = vpop.f32.mrf.mxu0
        %v1332 = vadd.f32 %v789, %v1331
        %v1333 = vpop.f32.mrf.mxu0
        %1334 = vmatprep.mubr.bf16.mxu0 0
        %1335 = vmatmul.mubr.bf16.gmra.mxu0 %v1052
        %v1336 = vpop.f32.mrf.mxu0
        %v1337 = vadd.f32 %v789, %v1336
        %v1338 = vpop.f32.mrf.mxu0
        %v1339 = vpop.f32.mrf.mxu0
        %v1340 = vadd.f32 %v789, %v1339
        %v1341 = vpop.f32.mrf.mxu0
        %1342 = vdwg.mxu0
        %v1343 = vmax.f32 %v1089, 0.0
        %v1344 = vmax.f32 %v1092, 0.0
        %v1345 = vmax.f32 %v1097, 0.0
        %v1346 = vmax.f32 %v1100, 0.0
        %v1347 = vmax.f32 %v1105, 0.0
        %v1348 = vmax.f32 %v1108, 0.0
        %v1349 = vmax.f32 %v1113, 0.0
        %v1350 = vmax.f32 %v1116, 0.0
        %v1351 = vmax.f32 %v1121, 0.0
        %v1352 = vmax.f32 %v1124, 0.0
        %v1353 = vmax.f32 %v1129, 0.0
        %v1354 = vmax.f32 %v1132, 0.0
        %v1355 = vmax.f32 %v1137, 0.0
        %v1356 = vmax.f32 %v1140, 0.0
        %v1357 = vmax.f32 %v1145, 0.0
        %v1358 = vmax.f32 %v1148, 0.0
        %v1359 = vmax.f32 %v1153, 0.0
        %v1360 = vmax.f32 %v1156, 0.0
        %v1361 = vmax.f32 %v1161, 0.0
        %v1362 = vmax.f32 %v1164, 0.0
        %v1363 = vmax.f32 %v1169, 0.0
        %v1364 = vmax.f32 %v1172, 0.0
        %v1365 = vmax.f32 %v1177, 0.0
        %v1366 = vmax.f32 %v1180, 0.0
        %v1367 = vmax.f32 %v1185, 0.0
        %v1368 = vmax.f32 %v1188, 0.0
        %v1369 = vmax.f32 %v1193, 0.0
        %v1370 = vmax.f32 %v1196, 0.0
        %v1371 = vmax.f32 %v1201, 0.0
        %v1372 = vmax.f32 %v1204, 0.0
        %v1373 = vmax.f32 %v1209, 0.0
        %v1374 = vmax.f32 %v1212, 0.0
        %v1375 = vmax.f32 %v1217, 0.0
        %v1376 = vmax.f32 %v1220, 0.0
        %v1377 = vmax.f32 %v1225, 0.0
        %v1378 = vmax.f32 %v1228, 0.0
        %v1379 = vmax.f32 %v1233, 0.0
        %v1380 = vmax.f32 %v1236, 0.0
        %v1381 = vmax.f32 %v1241, 0.0
        %v1382 = vmax.f32 %v1244, 0.0
        %v1383 = vmax.f32 %v1249, 0.0
        %v1384 = vmax.f32 %v1252, 0.0
        %v1385 = vmax.f32 %v1257, 0.0
        %v1386 = vmax.f32 %v1260, 0.0
        %v1387 = vmax.f32 %v1265, 0.0
        %v1388 = vmax.f32 %v1268, 0.0
        %v1389 = vmax.f32 %v1273, 0.0
        %v1390 = vmax.f32 %v1276, 0.0
        %v1391 = vmax.f32 %v1281, 0.0
        %v1392 = vmax.f32 %v1284, 0.0
        %v1393 = vmax.f32 %v1289, 0.0
        %v1394 = vmax.f32 %v1292, 0.0
        %v1395 = vmax.f32 %v1297, 0.0
        %v1396 = vmax.f32 %v1300, 0.0
        %v1397 = vmax.f32 %v1305, 0.0
        %v1398 = vmax.f32 %v1308, 0.0
        %v1399 = vmax.f32 %v1313, 0.0
        %v1400 = vmax.f32 %v1316, 0.0
        %v1401 = vmax.f32 %v1321, 0.0
        %v1402 = vmax.f32 %v1324, 0.0
        %v1403 = vmax.f32 %v1329, 0.0
        %v1404 = vmax.f32 %v1332, 0.0
        %v1405 = vmax.f32 %v1337, 0.0
        %v1406 = vmax.f32 %v1340, 0.0
        %v1407 = vpack.c.bf16 %v1344, %v1343
        %v1408 = vpack.c.bf16 %v1346, %v1345
        %v1409 = vpack.c.bf16 %v1348, %v1347
        %v1410 = vpack.c.bf16 %v1350, %v1349
        %v1411 = vpack.c.bf16 %v1352, %v1351
        %v1412 = vpack.c.bf16 %v1354, %v1353
        %v1413 = vpack.c.bf16 %v1356, %v1355
        %v1414 = vpack.c.bf16 %v1358, %v1357
        %v1415 = vpack.c.bf16 %v1360, %v1359
        %v1416 = vpack.c.bf16 %v1362, %v1361
        %v1417 = vpack.c.bf16 %v1364, %v1363
        %v1418 = vpack.c.bf16 %v1366, %v1365
        %v1419 = vpack.c.bf16 %v1368, %v1367
        %v1420 = vpack.c.bf16 %v1370, %v1369
        %v1421 = vpack.c.bf16 %v1372, %v1371
        %v1422 = vpack.c.bf16 %v1374, %v1373
        %v1423 = vpack.c.bf16 %v1376, %v1375
        %v1424 = vpack.c.bf16 %v1378, %v1377
        %v1425 = vpack.c.bf16 %v1380, %v1379
        %v1426 = vpack.c.bf16 %v1382, %v1381
        %v1427 = vpack.c.bf16 %v1384, %v1383
        %v1428 = vpack.c.bf16 %v1386, %v1385
        %v1429 = vpack.c.bf16 %v1388, %v1387
        %v1430 = vpack.c.bf16 %v1390, %v1389
        %v1431 = vpack.c.bf16 %v1392, %v1391
        %v1432 = vpack.c.bf16 %v1394, %v1393
        %v1433 = vpack.c.bf16 %v1396, %v1395
        %v1434 = vpack.c.bf16 %v1398, %v1397
        %v1435 = vpack.c.bf16 %v1400, %v1399
        %v1436 = vpack.c.bf16 %v1402, %v1401
        %v1437 = vpack.c.bf16 %v1404, %v1403
        %v1438 = vpack.c.bf16 %v1406, %v1405
        %v1439 = vld [vmem:[%s9] sm:$0xf]
        %v1440 = vld [vmem:[%s9 + $0x4] sm:$0xf]
        %v1441 = vld [vmem:[%s10] sm:$0x1]
        %v1443 = vlaneseq
        %v1444 = vshrl.u32 %v1443, 7
        %v1445 = vsub.s32 0, %v1444
        %v1446 = vrot.slane %v1441, %v1445
        %v1450 = vunpack.c.l.b16 %v1439
        %v1451 = vunpack.c.l.b16 %v1440
        %v1452 = vpack.c.b16 %v1451, %v1450
        %v1455 = vsel %vm957, %v1407, 0
        %v1458 = vsel %vm957, %v1408, 0
        %v1461 = vsel %vm957, %v1409, 0
        %v1464 = vsel %vm957, %v1410, 0
        %v1467 = vsel %vm957, %v1411, 0
        %v1470 = vsel %vm957, %v1412, 0
        %v1473 = vsel %vm957, %v1413, 0
        %v1476 = vsel %vm957, %v1414, 0
        %v1479 = vsel %vm957, %v1415, 0
        %v1482 = vsel %vm957, %v1416, 0
        %v1485 = vsel %vm957, %v1417, 0
        %v1488 = vsel %vm957, %v1418, 0
        %v1491 = vsel %vm957, %v1419, 0
        %v1494 = vsel %vm957, %v1420, 0
        %v1497 = vsel %vm957, %v1421, 0
        %v1500 = vsel %vm957, %v1422, 0
        %v1503 = vsel %vm957, %v1423, 0
        %v1506 = vsel %vm957, %v1424, 0
        %v1509 = vsel %vm957, %v1425, 0
        %v1512 = vsel %vm957, %v1426, 0
        %v1515 = vsel %vm957, %v1427, 0
        %v1518 = vsel %vm957, %v1428, 0
        %v1521 = vsel %vm957, %v1429, 0
        %v1524 = vsel %vm957, %v1430, 0
        %v1527 = vsel %vm957, %v1431, 0
        %v1530 = vsel %vm957, %v1432, 0
        %v1533 = vsel %vm957, %v1433, 0
        %v1536 = vsel %vm957, %v1434, 0
        %v1539 = vsel %vm957, %v1435, 0
        %v1542 = vsel %vm957, %v1436, 0
        %v1545 = vsel %vm957, %v1437, 0
        %v1548 = vsel %vm957, %v1438, 0
        %1550 = vmatprep.subr.bf16.mxu0 0
        %1551 = vmatpush1.bf16.msra.mxu0 0
        %1552 = vmatprep.subr.bf16.mxu0 0
        %1553 = vmatpush1.bf16.msra.mxu0 0
        %1554 = vmatprep.subr.bf16.mxu0 0
        %1555 = vmatpush1.bf16.msra.mxu0 0
        %1556 = vmatprep.subr.bf16.mxu0 0
        %1557 = vmatpush1.bf16.msra.mxu0 0
        %1558 = vmatprep.subr.bf16.mxu0 0
        %1559 = vmatpush1.bf16.msra.mxu0 0
        %1560 = vmatprep.subr.bf16.mxu0 0
        %1561 = vmatpush1.bf16.msra.mxu0 0
        %1562 = vmatprep.subr.bf16.mxu0 0
        %1563 = vmatpush1.bf16.msra.mxu0 0
        %1564 = vmatprep.subr.bf16.mxu0 0
        %1565 = vmatpush1.bf16.msra.mxu0 %v1452
        %1566 = vmatprep.subr.bf16.mxu0 0
        %1567 = vmatpush2.bf16.msra.mxu0 0
        %1568 = vmatprep.subr.bf16.mxu0 0
        %1569 = vmatpush2.bf16.msra.mxu0 0
        %1570 = vmatprep.subr.bf16.mxu0 0
        %1571 = vmatpush2.bf16.msra.mxu0 0
        %1572 = vmatprep.subr.bf16.mxu0 0
        %1573 = vmatpush2.bf16.msra.mxu0 0
        %1574 = vmatprep.subr.bf16.mxu0 0
        %1575 = vmatpush2.bf16.msra.mxu0 0
        %1576 = vmatprep.subr.bf16.mxu0 0
        %1577 = vmatpush2.bf16.msra.mxu0 0
        %1578 = vmatprep.subr.bf16.mxu0 0
        %1579 = vmatpush2.bf16.msra.mxu0 0
        %1580 = vmatprep.subr.bf16.mxu0 0
        %1581 = vmatpush2.bf16.msra.mxu0 0
        %1582 = vmatprep.mubr.bf16.mxu0 0
        %1583 = vmatmul.mubr.bf16.gmra.mxu0 %v1455
        %v1584 = vpop.f32.mrf.mxu0
        %v1585 = vadd.f32 %v1446, %v1584
        %v1586 = vpop.f32.mrf.mxu0
        %v1587 = vpop.f32.mrf.mxu0
        %v1588 = vadd.f32 %v1446, %v1587
        %v1589 = vpop.f32.mrf.mxu0
        %1590 = vmatprep.mubr.bf16.mxu0 0
        %1591 = vmatmul.mubr.bf16.gmra.mxu0 %v1458
        %v1592 = vpop.f32.mrf.mxu0
        %v1593 = vadd.f32 %v1446, %v1592
        %v1594 = vpop.f32.mrf.mxu0
        %v1595 = vpop.f32.mrf.mxu0
        %v1596 = vadd.f32 %v1446, %v1595
        %v1597 = vpop.f32.mrf.mxu0
        %1598 = vmatprep.mubr.bf16.mxu0 0
        %1599 = vmatmul.mubr.bf16.gmra.mxu0 %v1461
        %v1600 = vpop.f32.mrf.mxu0
        %v1601 = vadd.f32 %v1446, %v1600
        %v1602 = vpop.f32.mrf.mxu0
        %v1603 = vpop.f32.mrf.mxu0
        %v1604 = vadd.f32 %v1446, %v1603
        %v1605 = vpop.f32.mrf.mxu0
        %1606 = vmatprep.mubr.bf16.mxu0 0
        %1607 = vmatmul.mubr.bf16.gmra.mxu0 %v1464
        %v1608 = vpop.f32.mrf.mxu0
        %v1609 = vadd.f32 %v1446, %v1608
        %v1610 = vpop.f32.mrf.mxu0
        %v1611 = vpop.f32.mrf.mxu0
        %v1612 = vadd.f32 %v1446, %v1611
        %v1613 = vpop.f32.mrf.mxu0
        %1614 = vmatprep.mubr.bf16.mxu0 0
        %1615 = vmatmul.mubr.bf16.gmra.mxu0 %v1467
        %v1616 = vpop.f32.mrf.mxu0
        %v1617 = vadd.f32 %v1446, %v1616
        %v1618 = vpop.f32.mrf.mxu0
        %v1619 = vpop.f32.mrf.mxu0
        %v1620 = vadd.f32 %v1446, %v1619
        %v1621 = vpop.f32.mrf.mxu0
        %1622 = vmatprep.mubr.bf16.mxu0 0
        %1623 = vmatmul.mubr.bf16.gmra.mxu0 %v1470
        %v1624 = vpop.f32.mrf.mxu0
        %v1625 = vadd.f32 %v1446, %v1624
        %v1626 = vpop.f32.mrf.mxu0
        %v1627 = vpop.f32.mrf.mxu0
        %v1628 = vadd.f32 %v1446, %v1627
        %v1629 = vpop.f32.mrf.mxu0
        %1630 = vmatprep.mubr.bf16.mxu0 0
        %1631 = vmatmul.mubr.bf16.gmra.mxu0 %v1473
        %v1632 = vpop.f32.mrf.mxu0
        %v1633 = vadd.f32 %v1446, %v1632
        %v1634 = vpop.f32.mrf.mxu0
        %v1635 = vpop.f32.mrf.mxu0
        %v1636 = vadd.f32 %v1446, %v1635
        %v1637 = vpop.f32.mrf.mxu0
        %1638 = vmatprep.mubr.bf16.mxu0 0
        %1639 = vmatmul.mubr.bf16.gmra.mxu0 %v1476
        %v1640 = vpop.f32.mrf.mxu0
        %v1641 = vadd.f32 %v1446, %v1640
        %v1642 = vpop.f32.mrf.mxu0
        %v1643 = vpop.f32.mrf.mxu0
        %v1644 = vadd.f32 %v1446, %v1643
        %v1645 = vpop.f32.mrf.mxu0
        %1646 = vmatprep.mubr.bf16.mxu0 0
        %1647 = vmatmul.mubr.bf16.gmra.mxu0 %v1479
        %v1648 = vpop.f32.mrf.mxu0
        %v1649 = vadd.f32 %v1446, %v1648
        %v1650 = vpop.f32.mrf.mxu0
        %v1651 = vpop.f32.mrf.mxu0
        %v1652 = vadd.f32 %v1446, %v1651
        %v1653 = vpop.f32.mrf.mxu0
        %1654 = vmatprep.mubr.bf16.mxu0 0
        %1655 = vmatmul.mubr.bf16.gmra.mxu0 %v1482
        %v1656 = vpop.f32.mrf.mxu0
        %v1657 = vadd.f32 %v1446, %v1656
        %v1658 = vpop.f32.mrf.mxu0
        %v1659 = vpop.f32.mrf.mxu0
        %v1660 = vadd.f32 %v1446, %v1659
        %v1661 = vpop.f32.mrf.mxu0
        %1662 = vmatprep.mubr.bf16.mxu0 0
        %1663 = vmatmul.mubr.bf16.gmra.mxu0 %v1485
        %v1664 = vpop.f32.mrf.mxu0
        %v1665 = vadd.f32 %v1446, %v1664
        %v1666 = vpop.f32.mrf.mxu0
        %v1667 = vpop.f32.mrf.mxu0
        %v1668 = vadd.f32 %v1446, %v1667
        %v1669 = vpop.f32.mrf.mxu0
        %1670 = vmatprep.mubr.bf16.mxu0 0
        %1671 = vmatmul.mubr.bf16.gmra.mxu0 %v1488
        %v1672 = vpop.f32.mrf.mxu0
        %v1673 = vadd.f32 %v1446, %v1672
        %v1674 = vpop.f32.mrf.mxu0
        %v1675 = vpop.f32.mrf.mxu0
        %v1676 = vadd.f32 %v1446, %v1675
        %v1677 = vpop.f32.mrf.mxu0
        %1678 = vmatprep.mubr.bf16.mxu0 0
        %1679 = vmatmul.mubr.bf16.gmra.mxu0 %v1491
        %v1680 = vpop.f32.mrf.mxu0
        %v1681 = vadd.f32 %v1446, %v1680
        %v1682 = vpop.f32.mrf.mxu0
        %v1683 = vpop.f32.mrf.mxu0
        %v1684 = vadd.f32 %v1446, %v1683
        %v1685 = vpop.f32.mrf.mxu0
        %1686 = vmatprep.mubr.bf16.mxu0 0
        %1687 = vmatmul.mubr.bf16.gmra.mxu0 %v1494
        %v1688 = vpop.f32.mrf.mxu0
        %v1689 = vadd.f32 %v1446, %v1688
        %v1690 = vpop.f32.mrf.mxu0
        %v1691 = vpop.f32.mrf.mxu0
        %v1692 = vadd.f32 %v1446, %v1691
        %v1693 = vpop.f32.mrf.mxu0
        %1694 = vmatprep.mubr.bf16.mxu0 0
        %1695 = vmatmul.mubr.bf16.gmra.mxu0 %v1497
        %v1696 = vpop.f32.mrf.mxu0
        %v1697 = vadd.f32 %v1446, %v1696
        %v1698 = vpop.f32.mrf.mxu0
        %v1699 = vpop.f32.mrf.mxu0
        %v1700 = vadd.f32 %v1446, %v1699
        %v1701 = vpop.f32.mrf.mxu0
        %1702 = vmatprep.mubr.bf16.mxu0 0
        %1703 = vmatmul.mubr.bf16.gmra.mxu0 %v1500
        %v1704 = vpop.f32.mrf.mxu0
        %v1705 = vadd.f32 %v1446, %v1704
        %v1706 = vpop.f32.mrf.mxu0
        %v1707 = vpop.f32.mrf.mxu0
        %v1708 = vadd.f32 %v1446, %v1707
        %v1709 = vpop.f32.mrf.mxu0
        %1710 = vmatprep.mubr.bf16.mxu0 0
        %1711 = vmatmul.mubr.bf16.gmra.mxu0 %v1503
        %v1712 = vpop.f32.mrf.mxu0
        %v1713 = vadd.f32 %v1446, %v1712
        %v1714 = vpop.f32.mrf.mxu0
        %v1715 = vpop.f32.mrf.mxu0
        %v1716 = vadd.f32 %v1446, %v1715
        %v1717 = vpop.f32.mrf.mxu0
        %1718 = vmatprep.mubr.bf16.mxu0 0
        %1719 = vmatmul.mubr.bf16.gmra.mxu0 %v1506
        %v1720 = vpop.f32.mrf.mxu0
        %v1721 = vadd.f32 %v1446, %v1720
        %v1722 = vpop.f32.mrf.mxu0
        %v1723 = vpop.f32.mrf.mxu0
        %v1724 = vadd.f32 %v1446, %v1723
        %v1725 = vpop.f32.mrf.mxu0
        %1726 = vmatprep.mubr.bf16.mxu0 0
        %1727 = vmatmul.mubr.bf16.gmra.mxu0 %v1509
        %v1728 = vpop.f32.mrf.mxu0
        %v1729 = vadd.f32 %v1446, %v1728
        %v1730 = vpop.f32.mrf.mxu0
        %v1731 = vpop.f32.mrf.mxu0
        %v1732 = vadd.f32 %v1446, %v1731
        %v1733 = vpop.f32.mrf.mxu0
        %1734 = vmatprep.mubr.bf16.mxu0 0
        %1735 = vmatmul.mubr.bf16.gmra.mxu0 %v1512
        %v1736 = vpop.f32.mrf.mxu0
        %v1737 = vadd.f32 %v1446, %v1736
        %v1738 = vpop.f32.mrf.mxu0
        %v1739 = vpop.f32.mrf.mxu0
        %v1740 = vadd.f32 %v1446, %v1739
        %v1741 = vpop.f32.mrf.mxu0
        %1742 = vmatprep.mubr.bf16.mxu0 0
        %1743 = vmatmul.mubr.bf16.gmra.mxu0 %v1515
        %v1744 = vpop.f32.mrf.mxu0
        %v1745 = vadd.f32 %v1446, %v1744
        %v1746 = vpop.f32.mrf.mxu0
        %v1747 = vpop.f32.mrf.mxu0
        %v1748 = vadd.f32 %v1446, %v1747
        %v1749 = vpop.f32.mrf.mxu0
        %1750 = vmatprep.mubr.bf16.mxu0 0
        %1751 = vmatmul.mubr.bf16.gmra.mxu0 %v1518
        %v1752 = vpop.f32.mrf.mxu0
        %v1753 = vadd.f32 %v1446, %v1752
        %v1754 = vpop.f32.mrf.mxu0
        %v1755 = vpop.f32.mrf.mxu0
        %v1756 = vadd.f32 %v1446, %v1755
        %v1757 = vpop.f32.mrf.mxu0
        %1758 = vmatprep.mubr.bf16.mxu0 0
        %1759 = vmatmul.mubr.bf16.gmra.mxu0 %v1521
        %v1760 = vpop.f32.mrf.mxu0
        %v1761 = vadd.f32 %v1446, %v1760
        %v1762 = vpop.f32.mrf.mxu0
        %v1763 = vpop.f32.mrf.mxu0
        %v1764 = vadd.f32 %v1446, %v1763
        %v1765 = vpop.f32.mrf.mxu0
        %1766 = vmatprep.mubr.bf16.mxu0 0
        %1767 = vmatmul.mubr.bf16.gmra.mxu0 %v1524
        %v1768 = vpop.f32.mrf.mxu0
        %v1769 = vadd.f32 %v1446, %v1768
        %v1770 = vpop.f32.mrf.mxu0
        %v1771 = vpop.f32.mrf.mxu0
        %v1772 = vadd.f32 %v1446, %v1771
        %v1773 = vpop.f32.mrf.mxu0
        %1774 = vmatprep.mubr.bf16.mxu0 0
        %1775 = vmatmul.mubr.bf16.gmra.mxu0 %v1527
        %v1776 = vpop.f32.mrf.mxu0
        %v1777 = vadd.f32 %v1446, %v1776
        %v1778 = vpop.f32.mrf.mxu0
        %v1779 = vpop.f32.mrf.mxu0
        %v1780 = vadd.f32 %v1446, %v1779
        %v1781 = vpop.f32.mrf.mxu0
        %1782 = vmatprep.mubr.bf16.mxu0 0
        %1783 = vmatmul.mubr.bf16.gmra.mxu0 %v1530
        %v1784 = vpop.f32.mrf.mxu0
        %v1785 = vadd.f32 %v1446, %v1784
        %v1786 = vpop.f32.mrf.mxu0
        %v1787 = vpop.f32.mrf.mxu0
        %v1788 = vadd.f32 %v1446, %v1787
        %v1789 = vpop.f32.mrf.mxu0
        %1790 = vmatprep.mubr.bf16.mxu0 0
        %1791 = vmatmul.mubr.bf16.gmra.mxu0 %v1533
        %v1792 = vpop.f32.mrf.mxu0
        %v1793 = vadd.f32 %v1446, %v1792
        %v1794 = vpop.f32.mrf.mxu0
        %v1795 = vpop.f32.mrf.mxu0
        %v1796 = vadd.f32 %v1446, %v1795
        %v1797 = vpop.f32.mrf.mxu0
        %1798 = vmatprep.mubr.bf16.mxu0 0
        %1799 = vmatmul.mubr.bf16.gmra.mxu0 %v1536
        %v1800 = vpop.f32.mrf.mxu0
        %v1801 = vadd.f32 %v1446, %v1800
        %v1802 = vpop.f32.mrf.mxu0
        %v1803 = vpop.f32.mrf.mxu0
        %v1804 = vadd.f32 %v1446, %v1803
        %v1805 = vpop.f32.mrf.mxu0
        %1806 = vmatprep.mubr.bf16.mxu0 0
        %1807 = vmatmul.mubr.bf16.gmra.mxu0 %v1539
        %v1808 = vpop.f32.mrf.mxu0
        %v1809 = vadd.f32 %v1446, %v1808
        %v1810 = vpop.f32.mrf.mxu0
        %v1811 = vpop.f32.mrf.mxu0
        %v1812 = vadd.f32 %v1446, %v1811
        %v1813 = vpop.f32.mrf.mxu0
        %1814 = vmatprep.mubr.bf16.mxu0 0
        %1815 = vmatmul.mubr.bf16.gmra.mxu0 %v1542
        %v1816 = vpop.f32.mrf.mxu0
        %v1817 = vadd.f32 %v1446, %v1816
        %v1818 = vpop.f32.mrf.mxu0
        %v1819 = vpop.f32.mrf.mxu0
        %v1820 = vadd.f32 %v1446, %v1819
        %v1821 = vpop.f32.mrf.mxu0
        %1822 = vmatprep.mubr.bf16.mxu0 0
        %1823 = vmatmul.mubr.bf16.gmra.mxu0 %v1545
        %v1824 = vpop.f32.mrf.mxu0
        %v1825 = vadd.f32 %v1446, %v1824
        %v1826 = vpop.f32.mrf.mxu0
        %v1827 = vpop.f32.mrf.mxu0
        %v1828 = vadd.f32 %v1446, %v1827
        %v1829 = vpop.f32.mrf.mxu0
        %1830 = vmatprep.mubr.bf16.mxu0 0
        %1831 = vmatmul.mubr.bf16.gmra.mxu0 %v1548
        %v1832 = vpop.f32.mrf.mxu0
        %v1833 = vadd.f32 %v1446, %v1832
        %v1834 = vpop.f32.mrf.mxu0
        %v1835 = vpop.f32.mrf.mxu0
        %v1836 = vadd.f32 %v1446, %v1835
        %v1837 = vpop.f32.mrf.mxu0
        %1838 = vdwg.mxu0
        %v1839 = vmax.f32 %v1585, 0.0
        %v1840 = vmax.f32 %v1588, 0.0
        %v1841 = vmax.f32 %v1593, 0.0
        %v1842 = vmax.f32 %v1596, 0.0
        %v1843 = vmax.f32 %v1601, 0.0
        %v1844 = vmax.f32 %v1604, 0.0
        %v1845 = vmax.f32 %v1609, 0.0
        %v1846 = vmax.f32 %v1612, 0.0
        %v1847 = vmax.f32 %v1617, 0.0
        %v1848 = vmax.f32 %v1620, 0.0
        %v1849 = vmax.f32 %v1625, 0.0
        %v1850 = vmax.f32 %v1628, 0.0
        %v1851 = vmax.f32 %v1633, 0.0
        %v1852 = vmax.f32 %v1636, 0.0
        %v1853 = vmax.f32 %v1641, 0.0
        %v1854 = vmax.f32 %v1644, 0.0
        %v1855 = vmax.f32 %v1649, 0.0
        %v1856 = vmax.f32 %v1652, 0.0
        %v1857 = vmax.f32 %v1657, 0.0
        %v1858 = vmax.f32 %v1660, 0.0
        %v1859 = vmax.f32 %v1665, 0.0
        %v1860 = vmax.f32 %v1668, 0.0
        %v1861 = vmax.f32 %v1673, 0.0
        %v1862 = vmax.f32 %v1676, 0.0
        %v1863 = vmax.f32 %v1681, 0.0
        %v1864 = vmax.f32 %v1684, 0.0
        %v1865 = vmax.f32 %v1689, 0.0
        %v1866 = vmax.f32 %v1692, 0.0
        %v1867 = vmax.f32 %v1697, 0.0
        %v1868 = vmax.f32 %v1700, 0.0
        %v1869 = vmax.f32 %v1705, 0.0
        %v1870 = vmax.f32 %v1708, 0.0
        %v1871 = vmax.f32 %v1713, 0.0
        %v1872 = vmax.f32 %v1716, 0.0
        %v1873 = vmax.f32 %v1721, 0.0
        %v1874 = vmax.f32 %v1724, 0.0
        %v1875 = vmax.f32 %v1729, 0.0
        %v1876 = vmax.f32 %v1732, 0.0
        %v1877 = vmax.f32 %v1737, 0.0
        %v1878 = vmax.f32 %v1740, 0.0
        %v1879 = vmax.f32 %v1745, 0.0
        %v1880 = vmax.f32 %v1748, 0.0
        %v1881 = vmax.f32 %v1753, 0.0
        %v1882 = vmax.f32 %v1756, 0.0
        %v1883 = vmax.f32 %v1761, 0.0
        %v1884 = vmax.f32 %v1764, 0.0
        %v1885 = vmax.f32 %v1769, 0.0
        %v1886 = vmax.f32 %v1772, 0.0
        %v1887 = vmax.f32 %v1777, 0.0
        %v1888 = vmax.f32 %v1780, 0.0
        %v1889 = vmax.f32 %v1785, 0.0
        %v1890 = vmax.f32 %v1788, 0.0
        %v1891 = vmax.f32 %v1793, 0.0
        %v1892 = vmax.f32 %v1796, 0.0
        %v1893 = vmax.f32 %v1801, 0.0
        %v1894 = vmax.f32 %v1804, 0.0
        %v1895 = vmax.f32 %v1809, 0.0
        %v1896 = vmax.f32 %v1812, 0.0
        %v1897 = vmax.f32 %v1817, 0.0
        %v1898 = vmax.f32 %v1820, 0.0
        %v1899 = vmax.f32 %v1825, 0.0
        %v1900 = vmax.f32 %v1828, 0.0
        %v1901 = vmax.f32 %v1833, 0.0
        %v1902 = vmax.f32 %v1836, 0.0
        %v1903 = vld [vmem:[%s641] sm:$0xf]
        %v1904 = vld [vmem:[%s641 + $0x4] sm:$0xf]
        %v1905 = vld [vmem:[%s641 + $0x8] sm:$0xf]
        %v1906 = vld [vmem:[%s641 + $0xc] sm:$0xf]
        %v1907 = vld [vmem:[%s641 + $0x10] sm:$0xf]
        %v1908 = vld [vmem:[%s641 + $0x14] sm:$0xf]
        %v1909 = vld [vmem:[%s641 + $0x18] sm:$0xf]
        %v1910 = vld [vmem:[%s641 + $0x1c] sm:$0xf]
        %v1911 = vld [vmem:[%s641 + $0x20] sm:$0xf]
        %v1912 = vld [vmem:[%s641 + $0x24] sm:$0xf]
        %v1913 = vld [vmem:[%s641 + $0x28] sm:$0xf]
        %v1914 = vld [vmem:[%s641 + $0x2c] sm:$0xf]
        %v1915 = vld [vmem:[%s641 + $0x30] sm:$0xf]
        %v1916 = vld [vmem:[%s641 + $0x34] sm:$0xf]
        %v1917 = vld [vmem:[%s641 + $0x38] sm:$0xf]
        %v1918 = vld [vmem:[%s641 + $0x3c] sm:$0xf]
        %v1919 = vld [vmem:[%s641 + $0x40] sm:$0xf]
        %v1920 = vld [vmem:[%s641 + $0x44] sm:$0xf]
        %v1921 = vld [vmem:[%s641 + $0x48] sm:$0xf]
        %v1922 = vld [vmem:[%s641 + $0x4c] sm:$0xf]
        %v1923 = vld [vmem:[%s641 + $0x50] sm:$0xf]
        %v1924 = vld [vmem:[%s641 + $0x54] sm:$0xf]
        %v1925 = vld [vmem:[%s641 + $0x58] sm:$0xf]
        %v1926 = vld [vmem:[%s641 + $0x5c] sm:$0xf]
        %v1927 = vld [vmem:[%s641 + $0x60] sm:$0xf]
        %v1928 = vld [vmem:[%s641 + $0x64] sm:$0xf]
        %v1929 = vld [vmem:[%s641 + $0x68] sm:$0xf]
        %v1930 = vld [vmem:[%s641 + $0x6c] sm:$0xf]
        %v1931 = vld [vmem:[%s641 + $0x70] sm:$0xf]
        %v1932 = vld [vmem:[%s641 + $0x74] sm:$0xf]
        %v1933 = vld [vmem:[%s641 + $0x78] sm:$0xf]
        %v1934 = vld [vmem:[%s641 + $0x7c] sm:$0xf]
        %v1935 = vld [vmem:[%s641 + $0x80] sm:$0xf]
        %v1936 = vld [vmem:[%s641 + $0x84] sm:$0xf]
        %v1937 = vld [vmem:[%s641 + $0x88] sm:$0xf]
        %v1938 = vld [vmem:[%s641 + $0x8c] sm:$0xf]
        %v1939 = vld [vmem:[%s641 + $0x90] sm:$0xf]
        %v1940 = vld [vmem:[%s641 + $0x94] sm:$0xf]
        %v1941 = vld [vmem:[%s641 + $0x98] sm:$0xf]
        %v1942 = vld [vmem:[%s641 + $0x9c] sm:$0xf]
        %v1943 = vld [vmem:[%s641 + $0xa0] sm:$0xf]
        %v1944 = vld [vmem:[%s641 + $0xa4] sm:$0xf]
        %v1945 = vld [vmem:[%s641 + $0xa8] sm:$0xf]
        %v1946 = vld [vmem:[%s641 + $0xac] sm:$0xf]
        %v1947 = vld [vmem:[%s641 + $0xb0] sm:$0xf]
        %v1948 = vld [vmem:[%s641 + $0xb4] sm:$0xf]
        %v1949 = vld [vmem:[%s641 + $0xb8] sm:$0xf]
        %v1950 = vld [vmem:[%s641 + $0xbc] sm:$0xf]
        %v1951 = vld [vmem:[%s641 + $0xc0] sm:$0xf]
        %v1952 = vld [vmem:[%s641 + $0xc4] sm:$0xf]
        %v1953 = vld [vmem:[%s641 + $0xc8] sm:$0xf]
        %v1954 = vld [vmem:[%s641 + $0xcc] sm:$0xf]
        %v1955 = vld [vmem:[%s641 + $0xd0] sm:$0xf]
        %v1956 = vld [vmem:[%s641 + $0xd4] sm:$0xf]
        %v1957 = vld [vmem:[%s641 + $0xd8] sm:$0xf]
        %v1958 = vld [vmem:[%s641 + $0xdc] sm:$0xf]
        %v1959 = vld [vmem:[%s641 + $0xe0] sm:$0xf]
        %v1960 = vld [vmem:[%s641 + $0xe4] sm:$0xf]
        %v1961 = vld [vmem:[%s641 + $0xe8] sm:$0xf]
        %v1962 = vld [vmem:[%s641 + $0xec] sm:$0xf]
        %v1963 = vld [vmem:[%s641 + $0xf0] sm:$0xf]
        %v1964 = vld [vmem:[%s641 + $0xf4] sm:$0xf]
        %v1965 = vld [vmem:[%s641 + $0xf8] sm:$0xf]
        %v1966 = vld [vmem:[%s641 + $0xfc] sm:$0xf]
        %v1967 = vunpack.c.l.bf16 %v1903
        %v1968 = vunpack.c.l.bf16 %v1904
        %v1969 = vunpack.c.l.bf16 %v1905
        %v1970 = vunpack.c.l.bf16 %v1906
        %v1971 = vunpack.c.l.bf16 %v1907
        %v1972 = vunpack.c.l.bf16 %v1908
        %v1973 = vunpack.c.l.bf16 %v1909
        %v1974 = vunpack.c.l.bf16 %v1910
        %v1975 = vunpack.c.l.bf16 %v1911
        %v1976 = vunpack.c.l.bf16 %v1912
        %v1977 = vunpack.c.l.bf16 %v1913
        %v1978 = vunpack.c.l.bf16 %v1914
        %v1979 = vunpack.c.l.bf16 %v1915
        %v1980 = vunpack.c.l.bf16 %v1916
        %v1981 = vunpack.c.l.bf16 %v1917
        %v1982 = vunpack.c.l.bf16 %v1918
        %v1983 = vunpack.c.l.bf16 %v1919
        %v1984 = vunpack.c.l.bf16 %v1920
        %v1985 = vunpack.c.l.bf16 %v1921
        %v1986 = vunpack.c.l.bf16 %v1922
        %v1987 = vunpack.c.l.bf16 %v1923
        %v1988 = vunpack.c.l.bf16 %v1924
        %v1989 = vunpack.c.l.bf16 %v1925
        %v1990 = vunpack.c.l.bf16 %v1926
        %v1991 = vunpack.c.l.bf16 %v1927
        %v1992 = vunpack.c.l.bf16 %v1928
        %v1993 = vunpack.c.l.bf16 %v1929
        %v1994 = vunpack.c.l.bf16 %v1930
        %v1995 = vunpack.c.l.bf16 %v1931
        %v1996 = vunpack.c.l.bf16 %v1932
        %v1997 = vunpack.c.l.bf16 %v1933
        %v1998 = vunpack.c.l.bf16 %v1934
        %v1999 = vunpack.c.l.bf16 %v1935
        %v2000 = vunpack.c.l.bf16 %v1936
        %v2001 = vunpack.c.l.bf16 %v1937
        %v2002 = vunpack.c.l.bf16 %v1938
        %v2003 = vunpack.c.l.bf16 %v1939
        %v2004 = vunpack.c.l.bf16 %v1940
        %v2005 = vunpack.c.l.bf16 %v1941
        %v2006 = vunpack.c.l.bf16 %v1942
        %v2007 = vunpack.c.l.bf16 %v1943
        %v2008 = vunpack.c.l.bf16 %v1944
        %v2009 = vunpack.c.l.bf16 %v1945
        %v2010 = vunpack.c.l.bf16 %v1946
        %v2011 = vunpack.c.l.bf16 %v1947
        %v2012 = vunpack.c.l.bf16 %v1948
        %v2013 = vunpack.c.l.bf16 %v1949
        %v2014 = vunpack.c.l.bf16 %v1950
        %v2015 = vunpack.c.l.bf16 %v1951
        %v2016 = vunpack.c.l.bf16 %v1952
        %v2017 = vunpack.c.l.bf16 %v1953
        %v2018 = vunpack.c.l.bf16 %v1954
        %v2019 = vunpack.c.l.bf16 %v1955
        %v2020 = vunpack.c.l.bf16 %v1956
        %v2021 = vunpack.c.l.bf16 %v1957
        %v2022 = vunpack.c.l.bf16 %v1958
        %v2023 = vunpack.c.l.bf16 %v1959
        %v2024 = vunpack.c.l.bf16 %v1960
        %v2025 = vunpack.c.l.bf16 %v1961
        %v2026 = vunpack.c.l.bf16 %v1962
        %v2027 = vunpack.c.l.bf16 %v1963
        %v2028 = vunpack.c.l.bf16 %v1964
        %v2029 = vunpack.c.l.bf16 %v1965
        %v2030 = vunpack.c.l.bf16 %v1966
        %v2031 = vadd.f32 %v1967, %v1839
        %v2032 = vadd.f32 %v1968, %v1840
        %v2033 = vadd.f32 %v1969, %v1841
        %v2034 = vadd.f32 %v1970, %v1842
        %v2035 = vadd.f32 %v1971, %v1843
        %v2036 = vadd.f32 %v1972, %v1844
        %v2037 = vadd.f32 %v1973, %v1845
        %v2038 = vadd.f32 %v1974, %v1846
        %v2039 = vadd.f32 %v1975, %v1847
        %v2040 = vadd.f32 %v1976, %v1848
        %v2041 = vadd.f32 %v1977, %v1849
        %v2042 = vadd.f32 %v1978, %v1850
        %v2043 = vadd.f32 %v1979, %v1851
        %v2044 = vadd.f32 %v1980, %v1852
        %v2045 = vadd.f32 %v1981, %v1853
        %v2046 = vadd.f32 %v1982, %v1854
        %v2047 = vadd.f32 %v1983, %v1855
        %v2048 = vadd.f32 %v1984, %v1856
        %v2049 = vadd.f32 %v1985, %v1857
        %v2050 = vadd.f32 %v1986, %v1858
        %v2051 = vadd.f32 %v1987, %v1859
        %v2052 = vadd.f32 %v1988, %v1860
        %v2053 = vadd.f32 %v1989, %v1861
        %v2054 = vadd.f32 %v1990, %v1862
        %v2055 = vadd.f32 %v1991, %v1863
        %v2056 = vadd.f32 %v1992, %v1864
        %v2057 = vadd.f32 %v1993, %v1865
        %v2058 = vadd.f32 %v1994, %v1866
        %v2059 = vadd.f32 %v1995, %v1867
        %v2060 = vadd.f32 %v1996, %v1868
        %v2061 = vadd.f32 %v1997, %v1869
        %v2062 = vadd.f32 %v1998, %v1870
        %v2063 = vadd.f32 %v1999, %v1871
        %v2064 = vadd.f32 %v2000, %v1872
        %v2065 = vadd.f32 %v2001, %v1873
        %v2066 = vadd.f32 %v2002, %v1874
        %v2067 = vadd.f32 %v2003, %v1875
        %v2068 = vadd.f32 %v2004, %v1876
        %v2069 = vadd.f32 %v2005, %v1877
        %v2070 = vadd.f32 %v2006, %v1878
        %v2071 = vadd.f32 %v2007, %v1879
        %v2072 = vadd.f32 %v2008, %v1880
        %v2073 = vadd.f32 %v2009, %v1881
        %v2074 = vadd.f32 %v2010, %v1882
        %v2075 = vadd.f32 %v2011, %v1883
        %v2076 = vadd.f32 %v2012, %v1884
        %v2077 = vadd.f32 %v2013, %v1885
        %v2078 = vadd.f32 %v2014, %v1886
        %v2079 = vadd.f32 %v2015, %v1887
        %v2080 = vadd.f32 %v2016, %v1888
        %v2081 = vadd.f32 %v2017, %v1889
        %v2082 = vadd.f32 %v2018, %v1890
        %v2083 = vadd.f32 %v2019, %v1891
        %v2084 = vadd.f32 %v2020, %v1892
        %v2085 = vadd.f32 %v2021, %v1893
        %v2086 = vadd.f32 %v2022, %v1894
        %v2087 = vadd.f32 %v2023, %v1895
        %v2088 = vadd.f32 %v2024, %v1896
        %v2089 = vadd.f32 %v2025, %v1897
        %v2090 = vadd.f32 %v2026, %v1898
        %v2091 = vadd.f32 %v2027, %v1899
        %v2092 = vadd.f32 %v2028, %v1900
        %v2093 = vadd.f32 %v2029, %v1901
        %v2094 = vadd.f32 %v2030, %v1902
        %v2095 = vmax.f32 %v2031, 0.0
        %v2096 = vmax.f32 %v2032, 0.0
        %v2097 = vmax.f32 %v2033, 0.0
        %v2098 = vmax.f32 %v2034, 0.0
        %v2099 = vmax.f32 %v2035, 0.0
        %v2100 = vmax.f32 %v2036, 0.0
        %v2101 = vmax.f32 %v2037, 0.0
        %v2102 = vmax.f32 %v2038, 0.0
        %v2103 = vmax.f32 %v2039, 0.0
        %v2104 = vmax.f32 %v2040, 0.0
        %v2105 = vmax.f32 %v2041, 0.0
        %v2106 = vmax.f32 %v2042, 0.0
        %v2107 = vmax.f32 %v2043, 0.0
        %v2108 = vmax.f32 %v2044, 0.0
        %v2109 = vmax.f32 %v2045, 0.0
        %v2110 = vmax.f32 %v2046, 0.0
        %v2111 = vmax.f32 %v2047, 0.0
        %v2112 = vmax.f32 %v2048, 0.0
        %v2113 = vmax.f32 %v2049, 0.0
        %v2114 = vmax.f32 %v2050, 0.0
        %v2115 = vmax.f32 %v2051, 0.0
        %v2116 = vmax.f32 %v2052, 0.0
        %v2117 = vmax.f32 %v2053, 0.0
        %v2118 = vmax.f32 %v2054, 0.0
        %v2119 = vmax.f32 %v2055, 0.0
        %v2120 = vmax.f32 %v2056, 0.0
        %v2121 = vmax.f32 %v2057, 0.0
        %v2122 = vmax.f32 %v2058, 0.0
        %v2123 = vmax.f32 %v2059, 0.0
        %v2124 = vmax.f32 %v2060, 0.0
        %v2125 = vmax.f32 %v2061, 0.0
        %v2126 = vmax.f32 %v2062, 0.0
        %v2127 = vmax.f32 %v2063, 0.0
        %v2128 = vmax.f32 %v2064, 0.0
        %v2129 = vmax.f32 %v2065, 0.0
        %v2130 = vmax.f32 %v2066, 0.0
        %v2131 = vmax.f32 %v2067, 0.0
        %v2132 = vmax.f32 %v2068, 0.0
        %v2133 = vmax.f32 %v2069, 0.0
        %v2134 = vmax.f32 %v2070, 0.0
        %v2135 = vmax.f32 %v2071, 0.0
        %v2136 = vmax.f32 %v2072, 0.0
        %v2137 = vmax.f32 %v2073, 0.0
        %v2138 = vmax.f32 %v2074, 0.0
        %v2139 = vmax.f32 %v2075, 0.0
        %v2140 = vmax.f32 %v2076, 0.0
        %v2141 = vmax.f32 %v2077, 0.0
        %v2142 = vmax.f32 %v2078, 0.0
        %v2143 = vmax.f32 %v2079, 0.0
        %v2144 = vmax.f32 %v2080, 0.0
        %v2145 = vmax.f32 %v2081, 0.0
        %v2146 = vmax.f32 %v2082, 0.0
        %v2147 = vmax.f32 %v2083, 0.0
        %v2148 = vmax.f32 %v2084, 0.0
        %v2149 = vmax.f32 %v2085, 0.0
        %v2150 = vmax.f32 %v2086, 0.0
        %v2151 = vmax.f32 %v2087, 0.0
        %v2152 = vmax.f32 %v2088, 0.0
        %v2153 = vmax.f32 %v2089, 0.0
        %v2154 = vmax.f32 %v2090, 0.0
        %v2155 = vmax.f32 %v2091, 0.0
        %v2156 = vmax.f32 %v2092, 0.0
        %v2157 = vmax.f32 %v2093, 0.0
        %v2158 = vmax.f32 %v2094, 0.0
        %s2159 = smul.u32 %s41, 64
        %v2160 = vlaneseq
        %v2161 = vshrl.u32 %v2160, 7
        %v2162 = vadd.s32 %v2161, 8
        %v2163 = vadd.s32 %v2161, 16
        %v2164 = vadd.s32 %v2161, 24
        %v2165 = vadd.s32 %v2161, 32
        %v2166 = vadd.s32 %v2161, 40
        %v2167 = vadd.s32 %v2161, 48
        %v2168 = vadd.s32 %v2161, 56
        %v2169 = vstv %s2159
        %v2170 = vadd.s32 %v2169, %v2161
        %v2171 = vadd.s32 %v2169, %v2162
        %v2172 = vadd.s32 %v2169, %v2163
        %v2173 = vadd.s32 %v2169, %v2164
        %v2174 = vadd.s32 %v2169, %v2165
        %v2175 = vadd.s32 %v2169, %v2166
        %v2176 = vadd.s32 %v2169, %v2167
        %v2177 = vadd.s32 %v2169, %v2168
        %v2178 = vld [vmem:[%s684] sm:$0xf]
        %v2179 = vlaneseq
        %v2180 = vshrl.u32 %v2179, 7
        %v2181 = vsub.s32 0, %v2180
        %v2182 = vrot.slane %v2178, %v2181
        %v2183 = vlaneseq
        %v2184 = vshrl.u32 %v2183, 7
        %v2185 = vsub.s32 1, %v2184
        %v2186 = vrot.slane %v2178, %v2185
        %v2187 = vlaneseq
        %v2188 = vshrl.u32 %v2187, 7
        %v2189 = vsub.s32 2, %v2188
        %v2190 = vrot.slane %v2178, %v2189
        %v2191 = vlaneseq
        %v2192 = vshrl.u32 %v2191, 7
        %v2193 = vsub.s32 3, %v2192
        %v2194 = vrot.slane %v2178, %v2193
        %vm2195 = vcmp.eq.s32.totalorder %v2182, %v2170
        %vm2196 = vcmp.eq.s32.totalorder %v2186, %v2170
        %vm2197 = vcmp.eq.s32.totalorder %v2190, %v2170
        %vm2198 = vcmp.eq.s32.totalorder %v2194, %v2170
        %vm2199 = vcmp.eq.s32.totalorder %v2182, %v2171
        %vm2200 = vcmp.eq.s32.totalorder %v2186, %v2171
        %vm2201 = vcmp.eq.s32.totalorder %v2190, %v2171
        %vm2202 = vcmp.eq.s32.totalorder %v2194, %v2171
        %vm2203 = vcmp.eq.s32.totalorder %v2182, %v2172
        %vm2204 = vcmp.eq.s32.totalorder %v2186, %v2172
        %vm2205 = vcmp.eq.s32.totalorder %v2190, %v2172
        %vm2206 = vcmp.eq.s32.totalorder %v2194, %v2172
        %vm2207 = vcmp.eq.s32.totalorder %v2182, %v2173
        %vm2208 = vcmp.eq.s32.totalorder %v2186, %v2173
        %vm2209 = vcmp.eq.s32.totalorder %v2190, %v2173
        %vm2210 = vcmp.eq.s32.totalorder %v2194, %v2173
        %vm2211 = vcmp.eq.s32.totalorder %v2182, %v2174
        %vm2212 = vcmp.eq.s32.totalorder %v2186, %v2174
        %vm2213 = vcmp.eq.s32.totalorder %v2190, %v2174
        %vm2214 = vcmp.eq.s32.totalorder %v2194, %v2174
        %vm2215 = vcmp.eq.s32.totalorder %v2182, %v2175
        %vm2216 = vcmp.eq.s32.totalorder %v2186, %v2175
        %vm2217 = vcmp.eq.s32.totalorder %v2190, %v2175
        %vm2218 = vcmp.eq.s32.totalorder %v2194, %v2175
        %vm2219 = vcmp.eq.s32.totalorder %v2182, %v2176
        %vm2220 = vcmp.eq.s32.totalorder %v2186, %v2176
        %vm2221 = vcmp.eq.s32.totalorder %v2190, %v2176
        %vm2222 = vcmp.eq.s32.totalorder %v2194, %v2176
        %vm2223 = vcmp.eq.s32.totalorder %v2182, %v2177
        %vm2224 = vcmp.eq.s32.totalorder %v2186, %v2177
        %vm2225 = vcmp.eq.s32.totalorder %v2190, %v2177
        %vm2226 = vcmp.eq.s32.totalorder %v2194, %v2177
        %v2227 = vsel %vm2195, 1, 0
        %v2228 = vsel %vm2196, 1, 0
        %v2229 = vsel %vm2197, 1, 0
        %v2230 = vsel %vm2198, 1, 0
        %v2231 = vsel %vm2199, 1, 0
        %v2232 = vsel %vm2200, 1, 0
        %v2233 = vsel %vm2201, 1, 0
        %v2234 = vsel %vm2202, 1, 0
        %v2235 = vsel %vm2203, 1, 0
        %v2236 = vsel %vm2204, 1, 0
        %v2237 = vsel %vm2205, 1, 0
        %v2238 = vsel %vm2206, 1, 0
        %v2239 = vsel %vm2207, 1, 0
        %v2240 = vsel %vm2208, 1, 0
        %v2241 = vsel %vm2209, 1, 0
        %v2242 = vsel %vm2210, 1, 0
        %v2243 = vsel %vm2211, 1, 0
        %v2244 = vsel %vm2212, 1, 0
        %v2245 = vsel %vm2213, 1, 0
        %v2246 = vsel %vm2214, 1, 0
        %v2247 = vsel %vm2215, 1, 0
        %v2248 = vsel %vm2216, 1, 0
        %v2249 = vsel %vm2217, 1, 0
        %v2250 = vsel %vm2218, 1, 0
        %v2251 = vsel %vm2219, 1, 0
        %v2252 = vsel %vm2220, 1, 0
        %v2253 = vsel %vm2221, 1, 0
        %v2254 = vsel %vm2222, 1, 0
        %v2255 = vsel %vm2223, 1, 0
        %v2256 = vsel %vm2224, 1, 0
        %v2257 = vsel %vm2225, 1, 0
        %v2258 = vsel %vm2226, 1, 0
        %v2259 = vcvt.s32.f32 %v2227
        %v2260 = vcvt.s32.f32 %v2228
        %v2261 = vcvt.s32.f32 %v2229
        %v2262 = vcvt.s32.f32 %v2230
        %v2263 = vcvt.s32.f32 %v2231
        %v2264 = vcvt.s32.f32 %v2232
        %v2265 = vcvt.s32.f32 %v2233
        %v2266 = vcvt.s32.f32 %v2234
        %v2267 = vcvt.s32.f32 %v2235
        %v2268 = vcvt.s32.f32 %v2236
        %v2269 = vcvt.s32.f32 %v2237
        %v2270 = vcvt.s32.f32 %v2238
        %v2271 = vcvt.s32.f32 %v2239
        %v2272 = vcvt.s32.f32 %v2240
        %v2273 = vcvt.s32.f32 %v2241
        %v2274 = vcvt.s32.f32 %v2242
        %v2275 = vcvt.s32.f32 %v2243
        %v2276 = vcvt.s32.f32 %v2244
        %v2277 = vcvt.s32.f32 %v2245
        %v2278 = vcvt.s32.f32 %v2246
        %v2279 = vcvt.s32.f32 %v2247
        %v2280 = vcvt.s32.f32 %v2248
        %v2281 = vcvt.s32.f32 %v2249
        %v2282 = vcvt.s32.f32 %v2250
        %v2283 = vcvt.s32.f32 %v2251
        %v2284 = vcvt.s32.f32 %v2252
        %v2285 = vcvt.s32.f32 %v2253
        %v2286 = vcvt.s32.f32 %v2254
        %v2287 = vcvt.s32.f32 %v2255
        %v2288 = vcvt.s32.f32 %v2256
        %v2289 = vcvt.s32.f32 %v2257
        %v2290 = vcvt.s32.f32 %v2258
        %v2291 = vpack.c.bf16 %v2263, %v2259
        %v2292 = vpack.c.bf16 %v2264, %v2260
        %v2293 = vpack.c.bf16 %v2265, %v2261
        %v2294 = vpack.c.bf16 %v2266, %v2262
        %v2295 = vpack.c.bf16 %v2271, %v2267
        %v2296 = vpack.c.bf16 %v2272, %v2268
        %v2297 = vpack.c.bf16 %v2273, %v2269
        %v2298 = vpack.c.bf16 %v2274, %v2270
        %v2299 = vpack.c.bf16 %v2279, %v2275
        %v2300 = vpack.c.bf16 %v2280, %v2276
        %v2301 = vpack.c.bf16 %v2281, %v2277
        %v2302 = vpack.c.bf16 %v2282, %v2278
        %v2303 = vpack.c.bf16 %v2287, %v2283
        %v2304 = vpack.c.bf16 %v2288, %v2284
        %v2305 = vpack.c.bf16 %v2289, %v2285
        %v2306 = vpack.c.bf16 %v2290, %v2286
        %v2307 = vld [vmem:[#allocation2] sm:$0xff]
        %v2308 = vld [vmem:[#allocation2 + $0x8] sm:$0xff]
        %v2309 = vld [vmem:[#allocation2 + $0x10] sm:$0xff]
        %v2310 = vld [vmem:[#allocation2 + $0x18] sm:$0xff]
        %v2311 = vld [vmem:[#allocation2 + $0x20] sm:$0xff]
        %v2312 = vld [vmem:[#allocation2 + $0x28] sm:$0xff]
        %v2313 = vld [vmem:[#allocation2 + $0x30] sm:$0xff]
        %v2314 = vld [vmem:[#allocation2 + $0x38] sm:$0xff]
        %v2315 = vpack.c.bf16 %v2096, %v2095
        %v2316 = vpack.c.bf16 %v2098, %v2097
        %v2317 = vpack.c.bf16 %v2100, %v2099
        %v2318 = vpack.c.bf16 %v2102, %v2101
        %v2319 = vpack.c.bf16 %v2104, %v2103
        %v2320 = vpack.c.bf16 %v2106, %v2105
        %v2321 = vpack.c.bf16 %v2108, %v2107
        %v2322 = vpack.c.bf16 %v2110, %v2109
        %v2323 = vpack.c.bf16 %v2112, %v2111
        %v2324 = vpack.c.bf16 %v2114, %v2113
        %v2325 = vpack.c.bf16 %v2116, %v2115
        %v2326 = vpack.c.bf16 %v2118, %v2117
        %v2327 = vpack.c.bf16 %v2120, %v2119
        %v2328 = vpack.c.bf16 %v2122, %v2121
        %v2329 = vpack.c.bf16 %v2124, %v2123
        %v2330 = vpack.c.bf16 %v2126, %v2125
        %v2331 = vpack.c.bf16 %v2128, %v2127
        %v2332 = vpack.c.bf16 %v2130, %v2129
        %v2333 = vpack.c.bf16 %v2132, %v2131
        %v2334 = vpack.c.bf16 %v2134, %v2133
        %v2335 = vpack.c.bf16 %v2136, %v2135
        %v2336 = vpack.c.bf16 %v2138, %v2137
        %v2337 = vpack.c.bf16 %v2140, %v2139
        %v2338 = vpack.c.bf16 %v2142, %v2141
        %v2339 = vpack.c.bf16 %v2144, %v2143
        %v2340 = vpack.c.bf16 %v2146, %v2145
        %v2341 = vpack.c.bf16 %v2148, %v2147
        %v2342 = vpack.c.bf16 %v2150, %v2149
        %v2343 = vpack.c.bf16 %v2152, %v2151
        %v2344 = vpack.c.bf16 %v2154, %v2153
        %v2345 = vpack.c.bf16 %v2156, %v2155
        %v2346 = vpack.c.bf16 %v2158, %v2157
        %2347 = vmatprep.subr.bf16.mxu0 0
        %2348 = vmatpush1.bf16.msra.mxu0 %v2322
        %2349 = vmatprep.subr.bf16.mxu0 0
        %2350 = vmatpush1.bf16.msra.mxu0 %v2321
        %2351 = vmatprep.subr.bf16.mxu0 0
        %2352 = vmatpush1.bf16.msra.mxu0 %v2320
        %2353 = vmatprep.subr.bf16.mxu0 0
        %2354 = vmatpush1.bf16.msra.mxu0 %v2319
        %2355 = vmatprep.subr.bf16.mxu0 0
        %2356 = vmatpush1.bf16.msra.mxu0 %v2318
        %2357 = vmatprep.subr.bf16.mxu0 0
        %2358 = vmatpush1.bf16.msra.mxu0 %v2317
        %2359 = vmatprep.subr.bf16.mxu0 0
        %2360 = vmatpush1.bf16.msra.mxu0 %v2316
        %2361 = vmatprep.subr.bf16.mxu0 0
        %2362 = vmatpush1.bf16.msra.mxu0 %v2315
        %2363 = vmatprep.subr.bf16.mxu0 0
        %2364 = vmatpush2.bf16.msra.mxu0 %v2330
        %2365 = vmatprep.subr.bf16.mxu0 0
        %2366 = vmatpush2.bf16.msra.mxu0 %v2329
        %2367 = vmatprep.subr.bf16.mxu0 0
        %2368 = vmatpush2.bf16.msra.mxu0 %v2328
        %2369 = vmatprep.subr.bf16.mxu0 0
        %2370 = vmatpush2.bf16.msra.mxu0 %v2327
        %2371 = vmatprep.subr.bf16.mxu0 0
        %2372 = vmatpush2.bf16.msra.mxu0 %v2326
        %2373 = vmatprep.subr.bf16.mxu0 0
        %2374 = vmatpush2.bf16.msra.mxu0 %v2325
        %2375 = vmatprep.subr.bf16.mxu0 0
        %2376 = vmatpush2.bf16.msra.mxu0 %v2324
        %2377 = vmatprep.subr.bf16.mxu0 0
        %2378 = vmatpush2.bf16.msra.mxu0 %v2323
        %2379 = vmatprep.mubr.bf16.mxu0 %v2292
        %2380 = vmatmul.mubr.bf16.gmra.mxu0 %v2291
        %v2381 = vpop.f32.mrf.mxu0
        %v2382 = vadd.f32 0.0, %v2381
        %v2383 = vpop.f32.mrf.mxu0
        %v2384 = vpop.f32.mrf.mxu0
        %v2385 = vadd.f32 0.0, %v2384
        %v2386 = vpop.f32.mrf.mxu0
        %2387 = vmatprep.mubr.bf16.mxu0 %v2296
        %2388 = vmatmul.mubr.bf16.gmra.mxu0 %v2295
        %v2389 = vpop.f32.mrf.mxu0
        %v2390 = vadd.f32 0.0, %v2389
        %v2391 = vpop.f32.mrf.mxu0
        %v2392 = vpop.f32.mrf.mxu0
        %v2393 = vadd.f32 0.0, %v2392
        %v2394 = vpop.f32.mrf.mxu0
        %2395 = vmatprep.mubr.bf16.mxu0 %v2300
        %2396 = vmatmul.mubr.bf16.gmra.mxu0 %v2299
        %v2397 = vpop.f32.mrf.mxu0
        %v2398 = vadd.f32 0.0, %v2397
        %v2399 = vpop.f32.mrf.mxu0
        %v2400 = vpop.f32.mrf.mxu0
        %v2401 = vadd.f32 0.0, %v2400
        %v2402 = vpop.f32.mrf.mxu0
        %2403 = vmatprep.mubr.bf16.mxu0 %v2304
        %2404 = vmatmul.mubr.bf16.gmra.mxu0 %v2303
        %v2405 = vpop.f32.mrf.mxu0
        %v2406 = vadd.f32 0.0, %v2405
        %v2407 = vpop.f32.mrf.mxu0
        %v2408 = vpop.f32.mrf.mxu0
        %v2409 = vadd.f32 0.0, %v2408
        %v2410 = vpop.f32.mrf.mxu0
        %2411 = vdwg.mxu0
        %2412 = vmatprep.subr.bf16.mxu0 0
        %2413 = vmatpush1.bf16.msra.mxu0 %v2338
        %2414 = vmatprep.subr.bf16.mxu0 0
        %2415 = vmatpush1.bf16.msra.mxu0 %v2337
        %2416 = vmatprep.subr.bf16.mxu0 0
        %2417 = vmatpush1.bf16.msra.mxu0 %v2336
        %2418 = vmatprep.subr.bf16.mxu0 0
        %2419 = vmatpush1.bf16.msra.mxu0 %v2335
        %2420 = vmatprep.subr.bf16.mxu0 0
        %2421 = vmatpush1.bf16.msra.mxu0 %v2334
        %2422 = vmatprep.subr.bf16.mxu0 0
        %2423 = vmatpush1.bf16.msra.mxu0 %v2333
        %2424 = vmatprep.subr.bf16.mxu0 0
        %2425 = vmatpush1.bf16.msra.mxu0 %v2332
        %2426 = vmatprep.subr.bf16.mxu0 0
        %2427 = vmatpush1.bf16.msra.mxu0 %v2331
        %2428 = vmatprep.subr.bf16.mxu0 0
        %2429 = vmatpush2.bf16.msra.mxu0 %v2346
        %2430 = vmatprep.subr.bf16.mxu0 0
        %2431 = vmatpush2.bf16.msra.mxu0 %v2345
        %2432 = vmatprep.subr.bf16.mxu0 0
        %2433 = vmatpush2.bf16.msra.mxu0 %v2344
        %2434 = vmatprep.subr.bf16.mxu0 0
        %2435 = vmatpush2.bf16.msra.mxu0 %v2343
        %2436 = vmatprep.subr.bf16.mxu0 0
        %2437 = vmatpush2.bf16.msra.mxu0 %v2342
        %2438 = vmatprep.subr.bf16.mxu0 0
        %2439 = vmatpush2.bf16.msra.mxu0 %v2341
        %2440 = vmatprep.subr.bf16.mxu0 0
        %2441 = vmatpush2.bf16.msra.mxu0 %v2340
        %2442 = vmatprep.subr.bf16.mxu0 0
        %2443 = vmatpush2.bf16.msra.mxu0 %v2339
        %2444 = vmatprep.mubr.bf16.mxu0 %v2294
        %2445 = vmatmul.mubr.bf16.gmra.mxu0 %v2293
        %v2446 = vpop.f32.mrf.mxu0
        %v2447 = vadd.f32 %v2382, %v2446
        %v2448 = vpop.f32.mrf.mxu0
        %v2449 = vpop.f32.mrf.mxu0
        %v2450 = vadd.f32 %v2385, %v2449
        %v2451 = vpop.f32.mrf.mxu0
        %2452 = vmatprep.mubr.bf16.mxu0 %v2298
        %2453 = vmatmul.mubr.bf16.gmra.mxu0 %v2297
        %v2454 = vpop.f32.mrf.mxu0
        %v2455 = vadd.f32 %v2390, %v2454
        %v2456 = vpop.f32.mrf.mxu0
        %v2457 = vpop.f32.mrf.mxu0
        %v2458 = vadd.f32 %v2393, %v2457
        %v2459 = vpop.f32.mrf.mxu0
        %2460 = vmatprep.mubr.bf16.mxu0 %v2302
        %2461 = vmatmul.mubr.bf16.gmra.mxu0 %v2301
        %v2462 = vpop.f32.mrf.mxu0
        %v2463 = vadd.f32 %v2398, %v2462
        %v2464 = vpop.f32.mrf.mxu0
        %v2465 = vpop.f32.mrf.mxu0
        %v2466 = vadd.f32 %v2401, %v2465
        %v2467 = vpop.f32.mrf.mxu0
        %2468 = vmatprep.mubr.bf16.mxu0 %v2306
        %2469 = vmatmul.mubr.bf16.gmra.mxu0 %v2305
        %v2470 = vpop.f32.mrf.mxu0
        %v2471 = vadd.f32 %v2406, %v2470
        %v2472 = vpop.f32.mrf.mxu0
        %v2473 = vpop.f32.mrf.mxu0
        %v2474 = vadd.f32 %v2409, %v2473
        %v2475 = vpop.f32.mrf.mxu0
        %2476 = vdwg.mxu0
        %v2477 = vadd.f32 %v2307, %v2447
        %v2478 = vadd.f32 %v2308, %v2450
        %v2479 = vadd.f32 %v2309, %v2455
        %v2480 = vadd.f32 %v2310, %v2458
        %v2481 = vadd.f32 %v2311, %v2463
        %v2482 = vadd.f32 %v2312, %v2466
        %v2483 = vadd.f32 %v2313, %v2471
        %v2484 = vadd.f32 %v2314, %v2474
        %2485 = vst [vmem:[#allocation2] sm:$0xff] %v2477
        %2486 = vst [vmem:[#allocation2 + $0x8] sm:$0xff] %v2478
        %2487 = vst [vmem:[#allocation2 + $0x10] sm:$0xff] %v2479
        %2488 = vst [vmem:[#allocation2 + $0x18] sm:$0xff] %v2480
        %2489 = vst [vmem:[#allocation2 + $0x20] sm:$0xff] %v2481
        %2490 = vst [vmem:[#allocation2 + $0x28] sm:$0xff] %v2482
        %2491 = vst [vmem:[#allocation2 + $0x30] sm:$0xff] %v2483
        %2492 = vst [vmem:[#allocation2 + $0x38] sm:$0xff] %v2484
      $region80: #{_gine_pallas.1} parent=71 // pred_fallthru
        _
      // Predicated region
      $region81: #{_gine_pallas.1} parent=71 // pred_check
        %p2493 = pneg %p701
      $region82: #{_gine_pallas.1} parent=71 // pred_check_branch
        %2495 = sbr.rel (%p2493) target = $region84
      $region83: #{_gine_pallas.1} parent=71 // pred_region
        %s2496 = sld [smem:[#allocation6]]
        %s2497 = sadd.f32 %s2496, 1.0
        %v2498 = vld [vmem:[%s627] sm:$0xff]
        %v2499 = vld [vmem:[%s627 + $0x8] sm:$0xff]
        %v2500 = vld [vmem:[%s627 + $0x10] sm:$0xff]
        %v2501 = vld [vmem:[%s627 + $0x18] sm:$0xff]
        %v2502 = vld [vmem:[%s627 + $0x20] sm:$0xff]
        %v2503 = vld [vmem:[%s627 + $0x28] sm:$0xff]
        %v2504 = vld [vmem:[%s627 + $0x30] sm:$0xff]
        %v2505 = vld [vmem:[%s627 + $0x38] sm:$0xff]
        %v2506 = vstv %s2497
        %v2507 = vmul.f32 %v2506, %v2498
        %v2508 = vmul.f32 %v2506, %v2499
        %v2509 = vmul.f32 %v2506, %v2500
        %v2510 = vmul.f32 %v2506, %v2501
        %v2511 = vmul.f32 %v2506, %v2502
        %v2512 = vmul.f32 %v2506, %v2503
        %v2513 = vmul.f32 %v2506, %v2504
        %v2514 = vmul.f32 %v2506, %v2505
        %v2515 = vld [vmem:[#allocation2] sm:$0xff]
        %v2516 = vld [vmem:[#allocation2 + $0x8] sm:$0xff]
        %v2517 = vld [vmem:[#allocation2 + $0x10] sm:$0xff]
        %v2518 = vld [vmem:[#allocation2 + $0x18] sm:$0xff]
        %v2519 = vld [vmem:[#allocation2 + $0x20] sm:$0xff]
        %v2520 = vld [vmem:[#allocation2 + $0x28] sm:$0xff]
        %v2521 = vld [vmem:[#allocation2 + $0x30] sm:$0xff]
        %v2522 = vld [vmem:[#allocation2 + $0x38] sm:$0xff]
        %v2523 = vadd.f32 %v2507, %v2515
        %v2524 = vadd.f32 %v2508, %v2516
        %v2525 = vadd.f32 %v2509, %v2517
        %v2526 = vadd.f32 %v2510, %v2518
        %v2527 = vadd.f32 %v2511, %v2519
        %v2528 = vadd.f32 %v2512, %v2520
        %v2529 = vadd.f32 %v2513, %v2521
        %v2530 = vadd.f32 %v2514, %v2522
        %v2531 = vpack.c.bf16 %v2524, %v2523
        %v2532 = vpack.c.bf16 %v2526, %v2525
        %v2533 = vpack.c.bf16 %v2528, %v2527
        %v2534 = vpack.c.bf16 %v2530, %v2529
        %v2535 = vld [vmem:[%s11] sm:$0xf]
        %v2536 = vld [vmem:[%s11 + $0x4] sm:$0xf]
        %v2537 = vld [vmem:[%s11 + $0x8] sm:$0xf]
        %v2538 = vld [vmem:[%s11 + $0xc] sm:$0xf]
        %v2539 = vld [vmem:[%s11 + $0x10] sm:$0xf]
        %v2540 = vld [vmem:[%s11 + $0x14] sm:$0xf]
        %v2541 = vld [vmem:[%s11 + $0x18] sm:$0xf]
        %v2542 = vld [vmem:[%s11 + $0x1c] sm:$0xf]
        %v2543 = vld [vmem:[%s11 + $0x20] sm:$0xf]
        %v2544 = vld [vmem:[%s11 + $0x24] sm:$0xf]
        %v2545 = vld [vmem:[%s11 + $0x28] sm:$0xf]
        %v2546 = vld [vmem:[%s11 + $0x2c] sm:$0xf]
        %v2547 = vld [vmem:[%s11 + $0x30] sm:$0xf]
        %v2548 = vld [vmem:[%s11 + $0x34] sm:$0xf]
        %v2549 = vld [vmem:[%s11 + $0x38] sm:$0xf]
        %v2550 = vld [vmem:[%s11 + $0x3c] sm:$0xf]
        %v2551 = vld [vmem:[%s12] sm:$0x1]
        %v2553 = vlaneseq
        %v2554 = vshrl.u32 %v2553, 7
        %v2555 = vsub.s32 0, %v2554
        %v2556 = vrot.slane %v2551, %v2555
        %v2574 = vunpack.c.l.b16 %v2535
        %v2575 = vunpack.c.l.b16 %v2536
        %v2576 = vunpack.c.l.b16 %v2537
        %v2577 = vunpack.c.l.b16 %v2538
        %v2578 = vunpack.c.l.b16 %v2539
        %v2579 = vunpack.c.l.b16 %v2540
        %v2580 = vunpack.c.l.b16 %v2541
        %v2581 = vunpack.c.l.b16 %v2542
        %v2582 = vunpack.c.l.b16 %v2543
        %v2583 = vunpack.c.l.b16 %v2544
        %v2584 = vunpack.c.l.b16 %v2545
        %v2585 = vunpack.c.l.b16 %v2546
        %v2586 = vunpack.c.l.b16 %v2547
        %v2587 = vunpack.c.l.b16 %v2548
        %v2588 = vunpack.c.l.b16 %v2549
        %v2589 = vunpack.c.l.b16 %v2550
        %v2590 = vpack.c.b16 %v2575, %v2574
        %v2591 = vpack.c.b16 %v2577, %v2576
        %v2592 = vpack.c.b16 %v2579, %v2578
        %v2593 = vpack.c.b16 %v2581, %v2580
        %v2594 = vpack.c.b16 %v2583, %v2582
        %v2595 = vpack.c.b16 %v2585, %v2584
        %v2596 = vpack.c.b16 %v2587, %v2586
        %v2597 = vpack.c.b16 %v2589, %v2588
        %2606 = vmatprep.subr.bf16.mxu0 0
        %2607 = vmatpush1.bf16.msra.mxu0 %v2597
        %2608 = vmatprep.subr.bf16.mxu0 0
        %2609 = vmatpush1.bf16.msra.mxu0 %v2596
        %2610 = vmatprep.subr.bf16.mxu0 0
        %2611 = vmatpush1.bf16.msra.mxu0 %v2595
        %2612 = vmatprep.subr.bf16.mxu0 0
        %2613 = vmatpush1.bf16.msra.mxu0 %v2594
        %2614 = vmatprep.subr.bf16.mxu0 0
        %2615 = vmatpush1.bf16.msra.mxu0 %v2593
        %2616 = vmatprep.subr.bf16.mxu0 0
        %2617 = vmatpush1.bf16.msra.mxu0 %v2592
        %2618 = vmatprep.subr.bf16.mxu0 0
        %2619 = vmatpush1.bf16.msra.mxu0 %v2591
        %2620 = vmatprep.subr.bf16.mxu0 0
        %2621 = vmatpush1.bf16.msra.mxu0 %v2590
        %2622 = vmatprep.subr.bf16.mxu0 0
        %2623 = vmatpush2.bf16.msra.mxu0 0
        %2624 = vmatprep.subr.bf16.mxu0 0
        %2625 = vmatpush2.bf16.msra.mxu0 0
        %2626 = vmatprep.subr.bf16.mxu0 0
        %2627 = vmatpush2.bf16.msra.mxu0 0
        %2628 = vmatprep.subr.bf16.mxu0 0
        %2629 = vmatpush2.bf16.msra.mxu0 0
        %2630 = vmatprep.subr.bf16.mxu0 0
        %2631 = vmatpush2.bf16.msra.mxu0 0
        %2632 = vmatprep.subr.bf16.mxu0 0
        %2633 = vmatpush2.bf16.msra.mxu0 0
        %2634 = vmatprep.subr.bf16.mxu0 0
        %2635 = vmatpush2.bf16.msra.mxu0 0
        %2636 = vmatprep.subr.bf16.mxu0 0
        %2637 = vmatpush2.bf16.msra.mxu0 0
        %2638 = vmatprep.mubr.bf16.mxu0 0
        %2639 = vmatmul.mubr.bf16.gmra.mxu0 %v2531
        %v2640 = vpop.f32.mrf.mxu0
        %v2641 = vadd.f32 %v2556, %v2640
        %v2642 = vpop.f32.mrf.mxu0
        %v2643 = vpop.f32.mrf.mxu0
        %v2644 = vadd.f32 %v2556, %v2643
        %v2645 = vpop.f32.mrf.mxu0
        %2646 = vmatprep.mubr.bf16.mxu0 0
        %2647 = vmatmul.mubr.bf16.gmra.mxu0 %v2532
        %v2648 = vpop.f32.mrf.mxu0
        %v2649 = vadd.f32 %v2556, %v2648
        %v2650 = vpop.f32.mrf.mxu0
        %v2651 = vpop.f32.mrf.mxu0
        %v2652 = vadd.f32 %v2556, %v2651
        %v2653 = vpop.f32.mrf.mxu0
        %2654 = vmatprep.mubr.bf16.mxu0 0
        %2655 = vmatmul.mubr.bf16.gmra.mxu0 %v2533
        %v2656 = vpop.f32.mrf.mxu0
        %v2657 = vadd.f32 %v2556, %v2656
        %v2658 = vpop.f32.mrf.mxu0
        %v2659 = vpop.f32.mrf.mxu0
        %v2660 = vadd.f32 %v2556, %v2659
        %v2661 = vpop.f32.mrf.mxu0
        %2662 = vmatprep.mubr.bf16.mxu0 0
        %2663 = vmatmul.mubr.bf16.gmra.mxu0 %v2534
        %v2664 = vpop.f32.mrf.mxu0
        %v2665 = vadd.f32 %v2556, %v2664
        %v2666 = vpop.f32.mrf.mxu0
        %v2667 = vpop.f32.mrf.mxu0
        %v2668 = vadd.f32 %v2556, %v2667
        %v2669 = vpop.f32.mrf.mxu0
        %2670 = vdwg.mxu0
        %v2671 = vmax.f32 %v2641, 0.0
        %v2672 = vmax.f32 %v2644, 0.0
        %v2673 = vmax.f32 %v2649, 0.0
        %v2674 = vmax.f32 %v2652, 0.0
        %v2675 = vmax.f32 %v2657, 0.0
        %v2676 = vmax.f32 %v2660, 0.0
        %v2677 = vmax.f32 %v2665, 0.0
        %v2678 = vmax.f32 %v2668, 0.0
        %v2679 = vpack.c.bf16 %v2672, %v2671
        %v2680 = vpack.c.bf16 %v2674, %v2673
        %v2681 = vpack.c.bf16 %v2676, %v2675
        %v2682 = vpack.c.bf16 %v2678, %v2677
        %v2683 = vld [vmem:[%s13] sm:$0xf]
        %v2684 = vld [vmem:[%s13 + $0x4] sm:$0xf]
        %v2685 = vld [vmem:[%s13 + $0x8] sm:$0xf]
        %v2686 = vld [vmem:[%s13 + $0xc] sm:$0xf]
        %v2687 = vld [vmem:[%s13 + $0x10] sm:$0xf]
        %v2688 = vld [vmem:[%s13 + $0x14] sm:$0xf]
        %v2689 = vld [vmem:[%s13 + $0x18] sm:$0xf]
        %v2690 = vld [vmem:[%s13 + $0x1c] sm:$0xf]
        %v2691 = vld [vmem:[%s13 + $0x20] sm:$0xf]
        %v2692 = vld [vmem:[%s13 + $0x24] sm:$0xf]
        %v2693 = vld [vmem:[%s13 + $0x28] sm:$0xf]
        %v2694 = vld [vmem:[%s13 + $0x2c] sm:$0xf]
        %v2695 = vld [vmem:[%s13 + $0x30] sm:$0xf]
        %v2696 = vld [vmem:[%s13 + $0x34] sm:$0xf]
        %v2697 = vld [vmem:[%s13 + $0x38] sm:$0xf]
        %v2698 = vld [vmem:[%s13 + $0x3c] sm:$0xf]
        %v2699 = vld [vmem:[%s14] sm:$0x1]
        %v2701 = vlaneseq
        %v2702 = vshrl.u32 %v2701, 7
        %v2703 = vsub.s32 0, %v2702
        %v2704 = vrot.slane %v2699, %v2703
        %v2722 = vunpack.c.l.b16 %v2683
        %v2723 = vunpack.c.l.b16 %v2684
        %v2724 = vunpack.c.l.b16 %v2685
        %v2725 = vunpack.c.l.b16 %v2686
        %v2726 = vunpack.c.l.b16 %v2687
        %v2727 = vunpack.c.l.b16 %v2688
        %v2728 = vunpack.c.l.b16 %v2689
        %v2729 = vunpack.c.l.b16 %v2690
        %v2730 = vunpack.c.l.b16 %v2691
        %v2731 = vunpack.c.l.b16 %v2692
        %v2732 = vunpack.c.l.b16 %v2693
        %v2733 = vunpack.c.l.b16 %v2694
        %v2734 = vunpack.c.l.b16 %v2695
        %v2735 = vunpack.c.l.b16 %v2696
        %v2736 = vunpack.c.l.b16 %v2697
        %v2737 = vunpack.c.l.b16 %v2698
        %v2738 = vpack.c.b16 %v2723, %v2722
        %v2739 = vpack.c.b16 %v2725, %v2724
        %v2740 = vpack.c.b16 %v2727, %v2726
        %v2741 = vpack.c.b16 %v2729, %v2728
        %v2742 = vpack.c.b16 %v2731, %v2730
        %v2743 = vpack.c.b16 %v2733, %v2732
        %v2744 = vpack.c.b16 %v2735, %v2734
        %v2745 = vpack.c.b16 %v2737, %v2736
        %2754 = vmatprep.subr.bf16.mxu0 0
        %2755 = vmatpush1.bf16.msra.mxu0 %v2745
        %2756 = vmatprep.subr.bf16.mxu0 0
        %2757 = vmatpush1.bf16.msra.mxu0 %v2744
        %2758 = vmatprep.subr.bf16.mxu0 0
        %2759 = vmatpush1.bf16.msra.mxu0 %v2743
        %2760 = vmatprep.subr.bf16.mxu0 0
        %2761 = vmatpush1.bf16.msra.mxu0 %v2742
        %2762 = vmatprep.subr.bf16.mxu0 0
        %2763 = vmatpush1.bf16.msra.mxu0 %v2741
        %2764 = vmatprep.subr.bf16.mxu0 0
        %2765 = vmatpush1.bf16.msra.mxu0 %v2740
        %2766 = vmatprep.subr.bf16.mxu0 0
        %2767 = vmatpush1.bf16.msra.mxu0 %v2739
        %2768 = vmatprep.subr.bf16.mxu0 0
        %2769 = vmatpush1.bf16.msra.mxu0 %v2738
        %2770 = vmatprep.subr.bf16.mxu0 0
        %2771 = vmatpush2.bf16.msra.mxu0 0
        %2772 = vmatprep.subr.bf16.mxu0 0
        %2773 = vmatpush2.bf16.msra.mxu0 0
        %2774 = vmatprep.subr.bf16.mxu0 0
        %2775 = vmatpush2.bf16.msra.mxu0 0
        %2776 = vmatprep.subr.bf16.mxu0 0
        %2777 = vmatpush2.bf16.msra.mxu0 0
        %2778 = vmatprep.subr.bf16.mxu0 0
        %2779 = vmatpush2.bf16.msra.mxu0 0
        %2780 = vmatprep.subr.bf16.mxu0 0
        %2781 = vmatpush2.bf16.msra.mxu0 0
        %2782 = vmatprep.subr.bf16.mxu0 0
        %2783 = vmatpush2.bf16.msra.mxu0 0
        %2784 = vmatprep.subr.bf16.mxu0 0
        %2785 = vmatpush2.bf16.msra.mxu0 0
        %2786 = vmatprep.mubr.bf16.mxu0 0
        %2787 = vmatmul.mubr.bf16.gmra.mxu0 %v2679
        %v2788 = vpop.f32.mrf.mxu0
        %v2789 = vadd.f32 %v2704, %v2788
        %v2790 = vpop.f32.mrf.mxu0
        %v2791 = vpop.f32.mrf.mxu0
        %v2792 = vadd.f32 %v2704, %v2791
        %v2793 = vpop.f32.mrf.mxu0
        %2794 = vmatprep.mubr.bf16.mxu0 0
        %2795 = vmatmul.mubr.bf16.gmra.mxu0 %v2680
        %v2796 = vpop.f32.mrf.mxu0
        %v2797 = vadd.f32 %v2704, %v2796
        %v2798 = vpop.f32.mrf.mxu0
        %v2799 = vpop.f32.mrf.mxu0
        %v2800 = vadd.f32 %v2704, %v2799
        %v2801 = vpop.f32.mrf.mxu0
        %2802 = vmatprep.mubr.bf16.mxu0 0
        %2803 = vmatmul.mubr.bf16.gmra.mxu0 %v2681
        %v2804 = vpop.f32.mrf.mxu0
        %v2805 = vadd.f32 %v2704, %v2804
        %v2806 = vpop.f32.mrf.mxu0
        %v2807 = vpop.f32.mrf.mxu0
        %v2808 = vadd.f32 %v2704, %v2807
        %v2809 = vpop.f32.mrf.mxu0
        %2810 = vmatprep.mubr.bf16.mxu0 0
        %2811 = vmatmul.mubr.bf16.gmra.mxu0 %v2682
        %v2812 = vpop.f32.mrf.mxu0
        %v2813 = vadd.f32 %v2704, %v2812
        %v2814 = vpop.f32.mrf.mxu0
        %v2815 = vpop.f32.mrf.mxu0
        %v2816 = vadd.f32 %v2704, %v2815
        %v2817 = vpop.f32.mrf.mxu0
        %2818 = vdwg.mxu0
        %2819 = vst [vmem:[%s698] sm:$0xff] %v2789
        %2820 = vst [vmem:[%s698 + $0x8] sm:$0xff] %v2792
        %2821 = vst [vmem:[%s698 + $0x10] sm:$0xff] %v2797
        %2822 = vst [vmem:[%s698 + $0x18] sm:$0xff] %v2800
        %2823 = vst [vmem:[%s698 + $0x20] sm:$0xff] %v2805
        %2824 = vst [vmem:[%s698 + $0x28] sm:$0xff] %v2808
        %2825 = vst [vmem:[%s698 + $0x30] sm:$0xff] %v2813
        %2826 = vst [vmem:[%s698 + $0x38] sm:$0xff] %v2816
      $region84: #{_gine_pallas.1} parent=71 // pred_fallthru
        _
      %s2827 = smul.u32 8, %s41
      %p2828 = scmp.lt.s32.totalorder %s2827, 15
      %s2829 = scalar_select %p2828, %s2827, 15
      %s2830 = smul.addr %s2829, 8
      %s2831 = scalar_lea.vmem %s15, %s2830
      // Predicated region
      $region85: #{_gine_pallas.1} parent=71 // pred_check
        %p2832 = pneg %p408
      $region86: #{_gine_pallas.1} parent=71 // pred_check_branch
        %2834 = sbr.rel (%p2832) target = $region88
      $region87: #{_gine_pallas.1} parent=71 // pred_region
        %s2835 = smul.u32 8, %s41
      $region88: #{_gine_pallas.1} parent=71 // pred_fallthru
        _
    $region72: #{_gine_pallas.1} parent=5 // pred_fallthru
      _
    %p2836 = scmp.le.s32.totalorder 2, %s32
    // Predicated region
    $region89: #{_gine_pallas.1} parent=5 // pred_check
      %p2837 = pneg %p2836
    $region90: #{_gine_pallas.1} parent=5 // pred_check_branch
      %2839 = sbr.rel (%p2837) target = $region92
    $region91: #{_gine_pallas.1} parent=5 // pred_region
      %s2840 = ssub.s32 %s32, 2
      // Predicated region
      $region93: #{_gine_pallas.1} parent=91 // pred_check
        %p2841 = pneg %p414
      $region94: #{_gine_pallas.1} parent=91 // pred_check_branch
        %2843 = sbr.rel (%p2841) target = $region96
      $region95: #{_gine_pallas.1} parent=91 // pred_region
        %s2844 = smul.u32 8, %s43
        %p2845 = scmp.lt.s32.totalorder %s2844, 15
        %s2846 = scalar_select %p2845, %s2844, 15
        %s2847 = smul.addr %s2846, 8
        %s2848 = scalar_lea.vmem %s15, %s2847
      $region96: #{_gine_pallas.1} parent=91 // pred_fallthru
        _
    $region92: #{_gine_pallas.1} parent=5 // pred_fallthru
      _
  $region6: #{_gine_pallas.1} parent=0 // loop_footer
    %s36 = sadd.s32 1, %s32
  $region7: #{_gine_pallas.1} parent=0 // loop_footer_branch
    %31 = sbr.rel target = $region3
  $region8: #{_gine_pallas.1} parent=0 // loop_exit
    _

</llo_original>
